<compile_context>
chip_gen: v6e
topology: v6e:2x2x1
jax: 0.10.0
libtpu: 0.0.40
codegen_flags: <defaults>
</compile_context>

<pallas_src>
import functools
import math

import jax
import jax.numpy as jnp
from jax.experimental import pallas as pl
from jax.experimental.pallas import tpu as pltpu

LANE = 128


def _pad_to(x: int, m: int) -> int:
    return ((x + m - 1) // m) * m


def _masked_log_softmax(logits, out_dim):
    """log_softmax over the first out_dim lanes; padded lanes masked to -1e30
    (not -inf, which would give NaN from inf-inf)."""
    lane = jax.lax.broadcasted_iota(jnp.int32, logits.shape, 1)
    logits = jnp.where(lane < out_dim, logits, -1e30)
    m = jnp.max(logits, axis=1, keepdims=True)
    z = logits - m
    lse = jnp.log(jnp.sum(jnp.exp(z), axis=1, keepdims=True))
    return z - lse


def _make_agg_kernel(neighbor_weight, tile_k, h_resident, fuse_head, out_dim):
    """Grid (row_blocks, k_blocks):
       acc += A_tile @ h_k (bf16 x bf16 -> f32);
       finalize: h = h_self + w*acc; a = relu(h @ W + b);
                 if fuse_head: out = log_softmax(a @ Wo + bo) else out = a."""
    nw = float(neighbor_weight)

    def kernel(*refs):
        if fuse_head:
            (adj_ref, h_self_ref, h_nb_ref, w_ref, b_ref,
             wo_ref, bo_ref, out_ref, acc_ref) = refs
        else:
            (adj_ref, h_self_ref, h_nb_ref, w_ref, b_ref,
             out_ref, acc_ref) = refs

        k = pl.program_id(1)

        @pl.when(k == 0)
        def _():
            acc_ref[...] = jnp.zeros_like(acc_ref)

        if h_resident:
            # h is VMEM-resident for the whole layer; slice the k-th row block.
            off = pl.multiple_of(k * tile_k, tile_k)
            hk = h_nb_ref[pl.ds(off, tile_k), :]
        else:
            hk = h_nb_ref[...]

        # Native bf16 x bf16 -> f32 MXU path. The bf16 adjacency is exact
        # (small integer edge counts); only the bf16 cast of h trades a little
        # precision for ~2-3x matmul throughput and half the adj VMEM traffic.
        acc_ref[...] += jnp.dot(adj_ref[...], hk.astype(jnp.bfloat16),
                                preferred_element_type=jnp.float32)

        @pl.when(k == pl.num_programs(1) - 1)
        def _():
            h = h_self_ref[...] + nw * acc_ref[...]
            z = jnp.dot(h, w_ref[...],
                        preferred_element_type=jnp.float32) + b_ref[...]
            a = jnp.maximum(z, 0.0)
            # TODO(synk): Dropout(p=0.4) omitted — eval/inference semantics (identity).
            if fuse_head:
                logits = jnp.dot(a, wo_ref[...],
                                 preferred_element_type=jnp.float32) + bo_ref[...]
                out_ref[...] = _masked_log_softmax(logits, out_dim)
            else:
                out_ref[...] = a

    return kernel


def _make_dense_kernel(fuse_head, out_dim):
    """Layer without neighborhood aggregation (include_neighbors=False),
    optionally fused with the output head."""

    def kernel(*refs):
        if fuse_head:
            h_ref, w_ref, b_ref, wo_ref, bo_ref, out_ref = refs
        else:
            h_ref, w_ref, b_ref, out_ref = refs
        z = jnp.dot(h_ref[...], w_ref[...],
                    preferred_element_type=jnp.float32) + b_ref[...]
        a = jnp.maximum(z, 0.0)
        # TODO(synk): Dropout(p=0.4) omitted — eval/inference semantics (identity).
        if fuse_head:
            logits = jnp.dot(a, wo_ref[...],
                             preferred_element_type=jnp.float32) + bo_ref[...]
            out_ref[...] = _masked_log_softmax(logits, out_dim)
        else:
            out_ref[...] = a

    return kernel


def _make_head_kernel(out_dim):
    """Standalone output head (only used when layer_count == 0)."""

    def kernel(h_ref, w_ref, b_ref, out_ref):
        logits = jnp.dot(h_ref[...], w_ref[...],
                         preferred_element_type=jnp.float32) + b_ref[...]
        out_ref[...] = _masked_log_softmax(logits, out_dim)

    return kernel


def custom_gnn_forward(features, edge_indices, params, *, layer_count,
                       neighbor_weight=1.0, include_neighbors=True,
                       tile_m=256, tile_k=512, dense_tile_m=512,
                       h_resident_budget=8 * 1024 * 1024):
    """JAX/Pallas equivalent of CustomGNN.forward (eval mode).

    features:     (N, input_dim) float32
    edge_indices: (2, E) int32 — [row, col]; edge e adds features[row[e]] into node col[e]
    params:       list of (W, b), PyTorch Linear convention W:(out, in), b:(out,)
                  length == layer_count + 1 (last entry is the output layer)
    """
    N, in_dim = features.shape
    out_dim = params[-1][0].shape[0]
    assert len(params) == layer_count + 1

    n128 = _pad_to(N, LANE)

    if include_neighbors and layer_count > 0:
        tm = min(tile_m, n128)
        tk = min(tile_k, n128)
        Np = _pad_to(N, math.lcm(tm, tk))
        # Keep >= 2 row blocks when possible so the "parallel" row axis can
        # actually shard across v7x's two TensorCores.
        while Np // tm < 2 and tm > LANE:
            tm = max(LANE, ((tm // 2) // LANE) * LANE)
            Np = _pad_to(N, math.lcm(tm, tk))
    else:
        tm = min(dense_tile_m, n128)
        tk = tm
        Np = _pad_to(N, tm)
        while Np // tm < 2 and tm > LANE:
            tm = max(LANE, ((tm // 2) // LANE) * LANE)
            Np = _pad_to(N, tm)

    # Lane-pad weights/biases to multiples of 128 and pre-transpose to (in, out).
    padded = []
    for W, b in params:
        fo, fi = W.shape
        fip, fop = _pad_to(fi, LANE), _pad_to(fo, LANE)
        Wp = jnp.zeros((fip, fop), jnp.float32).at[:fi, :fo].set(
            jnp.asarray(W, jnp.float32).T)
        bp = jnp.zeros((1, fop), jnp.float32).at[0, :fo].set(
            jnp.asarray(b, jnp.float32))
        padded.append((Wp, bp))

    Wo, bo = padded[-1]
    hid_p_head, out_p = Wo.shape

    # Pad features; zero padding (rows + lanes) stays zero through every layer
    # because padded weight rows/cols and padded adjacency rows/cols are zero.
    in_p = _pad_to(in_dim, LANE)
    h = jnp.zeros((Np, in_p), jnp.float32).at[:N, :in_dim].set(
        features.astype(jnp.float32))

    adj = None
    if include_neighbors and layer_count > 0:
        # Dense adjacency realizing index_add_(0, col, features[row]).  Built
        # directly in bf16 (exact for per-pair edge multiplicities <= 256) so
        # no Np^2 f32 intermediate is ever materialized.
        # TODO(synk): for large sparse graphs, replace with a block-sparse
        # PrefetchScalarGridSpec formulation that skips all-zero (TM, TK) tiles.
        row, col = edge_indices[0], edge_indices[1]
        adj = jnp.zeros((Np, Np), jnp.bfloat16).at[col, row].add(1.0)

    def _cparams(sem, vmem_est_bytes):
        # Budget: >= v5e's 16 MiB default scoped limit, <= ~48 MiB so it also
        # fits v7x's 64 MiB/TC physical VMEM with headroom.
        vmem = int(min(max(2 * vmem_est_bytes, 32 * 1024 * 1024),
                       48 * 1024 * 1024))
        return pltpu.CompilerParams(dimension_semantics=sem,
                                    vmem_limit_bytes=vmem)

    for l in range(layer_count):
        Wp, bp = padded[l]
        fin_p, fout_p = Wp.shape
        is_last = (l == layer_count - 1)
        out_w = out_p if is_last else fout_p

        if include_neighbors:
            # Make h VMEM-resident for the whole layer when it fits the budget
            # (DMA once per layer instead of once per row block).
            h_res = (Np * fin_p * 4) <= h_resident_budget
            kern = _make_agg_kernel(neighbor_weight, tk, h_res, is_last, out_dim)

            in_specs = [
                pl.BlockSpec((tm, tk), lambda i, k: (i, k)),               # adj tile (bf16)
                pl.BlockSpec((tm, fin_p), lambda i, k: (i, 0)),            # h (self rows)
                (pl.BlockSpec((Np, fin_p), lambda i, k: (0, 0)) if h_res   # h resident
                 else pl.BlockSpec((tk, fin_p), lambda i, k: (k, 0))),     # h streamed
                pl.BlockSpec((fin_p, fout_p), lambda i, k: (0, 0)),        # W (resident)
                pl.BlockSpec((1, fout_p), lambda i, k: (0, 0)),            # b (resident)
            ]
            args = [adj, h, h, Wp, bp]
            if is_last:
                in_specs += [pl.BlockSpec((hid_p_head, out_p), lambda i, k: (0, 0)),
                             pl.BlockSpec((1, out_p), lambda i, k: (0, 0))]
                args += [Wo, bo]

            vmem_est = (
                2 * tm * tk * 2                                       # adj double-buffered bf16
                + 2 * tm * fin_p * 4                                  # h_self
                + (2 * Np * fin_p * 4 if h_res else 2 * tk * fin_p * 4)  # h neighbor
                + fin_p * fout_p * 4 + fout_p * 4                     # W, b
                + tm * fin_p * 4                                      # acc scratch
                + 2 * tm * out_w * 4                                  # output
                + (hid_p_head * out_p * 4 + out_p * 4 if is_last else 0))

            h = pl.pallas_call(
                kern,
                out_shape=jax.ShapeDtypeStruct((Np, out_w), jnp.float32),
                grid_spec=pltpu.PrefetchScalarGridSpec(
                    num_scalar_prefetch=0,
                    grid=(Np // tm, Np // tk),
                    in_specs=in_specs,
                    out_specs=pl.BlockSpec((tm, out_w), lambda i, k: (i, 0)),
                    scratch_shapes=[pltpu.VMEM((tm, fin_p), jnp.float32)],
                ),
                compiler_params=_cparams(("parallel", "arbitrary"), vmem_est),
            )(*args)
        else:
            kern = _make_dense_kernel(is_last, out_dim)
            in_specs = [
                pl.BlockSpec((tm, fin_p), lambda i: (i, 0)),
                pl.BlockSpec((fin_p, fout_p), lambda i: (0, 0)),
                pl.BlockSpec((1, fout_p), lambda i: (0, 0)),
            ]
            args = [h, Wp, bp]
            if is_last:
                in_specs += [pl.BlockSpec((hid_p_head, out_p), lambda i: (0, 0)),
                             pl.BlockSpec((1, out_p), lambda i: (0, 0))]
                args += [Wo, bo]

            h = pl.pallas_call(
                kern,
                out_shape=jax.ShapeDtypeStruct((Np, out_w), jnp.float32),
                grid_spec=pltpu.PrefetchScalarGridSpec(
                    num_scalar_prefetch=0,
                    grid=(Np // tm,),
                    in_specs=in_specs,
                    out_specs=pl.BlockSpec((tm, out_w), lambda i: (i, 0)),
                ),
                compiler_params=_cparams(("parallel",), 8 * 1024 * 1024),
            )(*args)

    if layer_count == 0:
        # Only the output layer: standalone head on the raw (lane-padded) features.
        h = pl.pallas_call(
            _make_head_kernel(out_dim),
            out_shape=jax.ShapeDtypeStruct((Np, out_p), jnp.float32),
            grid_spec=pltpu.PrefetchScalarGridSpec(
                num_scalar_prefetch=0,
                grid=(Np // tm,),
                in_specs=[
                    pl.BlockSpec((tm, hid_p_head), lambda i: (i, 0)),
                    pl.BlockSpec((hid_p_head, out_p), lambda i: (0, 0)),
                    pl.BlockSpec((1, out_p), lambda i: (0, 0)),
                ],
                out_specs=pl.BlockSpec((tm, out_p), lambda i: (i, 0)),
            ),
            compiler_params=_cparams(("parallel",), 8 * 1024 * 1024),
        )(h, Wo, bo)

    return h[:N, :out_dim]


def _reference_forward(features, edge_indices, params, *, layer_count,
                       neighbor_weight=1.0, include_neighbors=True):
    """Pure-JAX f32 reference mirroring the PyTorch forward (eval mode)."""
    row, col = edge_indices[0], edge_indices[1]
    h = features.astype(jnp.float32)
    for l in range(layer_count):
        W, b = params[l]
        if include_neighbors:
            neigh = jnp.zeros_like(h).at[col].add(h[row])
            h = h + neighbor_weight * neigh
        h = h @ W.T + b
        h = jnp.maximum(h, 0.0)
    Wo, bo = params[-1]
    logits = h @ Wo.T + bo
    return jax.nn.log_softmax(logits, axis=1)


if __name__ == "__main__":
    # Small, deterministic synthetic problem (multiple row/k tiles exercised).
    N = 300           # number of nodes
    E = 1200          # number of edges
    INPUT_DIM = 16
    HIDDEN_DIM = 32
    OUTPUT_DIM = 8
    LAYER_COUNT = 2
    NEIGHBOR_WEIGHT = 1.0

    key = jax.random.PRNGKey(0)
    k_feat, k_row, k_col, *k_params = jax.random.split(key, 4 + 2 * (LAYER_COUNT + 1))

    features = jax.random.normal(k_feat, (N, INPUT_DIM), dtype=jnp.float32)
    row = jax.random.randint(k_row, (E,), 0, N, dtype=jnp.int32)
    col = jax.random.randint(k_col, (E,), 0, N, dtype=jnp.int32)
    edge_indices = jnp.stack([row, col], axis=0)

    # Parameters (deterministic): layer dims mirror the PyTorch __init__.
    dims = [(INPUT_DIM, HIDDEN_DIM)] + [(HIDDEN_DIM, HIDDEN_DIM)] * (LAYER_COUNT - 1) \
           + [(HIDDEN_DIM, OUTPUT_DIM)]
    params = []
    for i, (fan_in, fan_out) in enumerate(dims):
        kw, kb = jax.random.split(k_params[i])
        scale = 1.0 / jnp.sqrt(jnp.float32(fan_in))
        W = jax.random.uniform(kw, (fan_out, fan_in), jnp.float32, -scale, scale)
        b = jax.random.uniform(kb, (fan_out,), jnp.float32, -scale, scale)
        params.append((W, b))

    fwd = functools.partial(custom_gnn_forward, layer_count=LAYER_COUNT,
                            neighbor_weight=NEIGHBOR_WEIGHT, include_neighbors=True)

    out = jax.block_until_ready(fwd(features, edge_indices, params))

    ref = _reference_forward(features, edge_indices, params, layer_count=LAYER_COUNT,
                             neighbor_weight=NEIGHBOR_WEIGHT, include_neighbors=True)
    assert out.shape == (N, OUTPUT_DIM)
    # Tolerance reflects the deliberate bf16 cast of h in the aggregation matmul
    # (the adjacency itself is exact in bf16; accumulation stays f32).
    assert jnp.allclose(out, ref, atol=5e-2, rtol=5e-2), "Pallas output mismatch vs reference"

    print("KERNEL_OK")
</pallas_src>

<mosaic_0001>
module attributes {stable_mosaic.version = 11 : i64} {
  func.func @kernel(%arg0: i32, %arg1: i32, %arg2: memref<256x384xbf16, #tpu.memory_space<vmem>>, %arg3: memref<256x128xf32, #tpu.memory_space<vmem>>, %arg4: memref<768x128xf32, #tpu.memory_space<vmem>>, %arg5: memref<128x128xf32, #tpu.memory_space<vmem>>, %arg6: memref<1x128xf32, #tpu.memory_space<vmem>>, %arg7: memref<256x128xf32, #tpu.memory_space<vmem>>, %arg8: memref<256x128xf32, #tpu.memory_space<vmem>>) attributes {dimension_semantics = [#tpu.dimension_semantics<parallel>, #tpu.dimension_semantics<arbitrary>], iteration_bounds = array<i64: 3, 2>, scalar_prefetch = 0 : i64, scratch_operands = 1 : i64, tpu.core_type = #tpu.core_type<tc>, window_params = [{transform_indices = @transform_0, window_bounds = array<i64: 256, 384>}, {transform_indices = @transform_1, window_bounds = array<i64: 256, 128>}, {pipeline_mode = #tpu.pipeline_mode<synchronous>, transform_indices = @transform_2, window_bounds = array<i64: 768, 128>}, {pipeline_mode = #tpu.pipeline_mode<synchronous>, transform_indices = @transform_3, window_bounds = array<i64: 128, 128>}, {pipeline_mode = #tpu.pipeline_mode<synchronous>, transform_indices = @transform_4, window_bounds = array<i64: 1, 128>}, {transform_indices = @transform_5, window_bounds = array<i64: 256, 128>}]} {
    %c0_i32 = arith.constant 0 : i32
    %0 = arith.cmpi eq, %arg1, %c0_i32 : i32
    %1 = arith.extui %0 : i1 to i32
    %c0_i32_0 = arith.constant 0 : i32
    %2 = arith.cmpi ne, %1, %c0_i32_0 : i32
    scf.if %2 {
      %cst_8 = arith.constant 0.000000e+00 : f32
      %16 = vector.broadcast %cst_8 : f32 to vector<256x128xf32>
      %c0_9 = arith.constant 0 : index
      %c0_10 = arith.constant 0 : index
      %17 = vector.load %arg8[%c0_9, %c0_10] : memref<256x128xf32, #tpu.memory_space<vmem>>, vector<256x128xf32>
      tpu.vector_store %arg8[%c0_9, %c0_10], %16 {strides = array<i32>} : memref<256x128xf32, #tpu.memory_space<vmem>>, vector<256x128xf32>,
    } else {
    }
    %c384_i32 = arith.constant 384 : i32
    %3 = arith.muli %arg1, %c384_i32 : i32
    %4 = tpu.assume_multiple %3, 384 : i32
    %5 = arith.index_cast %4 : i32 to index
    %c0 = arith.constant 0 : index
    %6 = vector.load %arg4[%5, %c0] : memref<768x128xf32, #tpu.memory_space<vmem>>, vector<384x128xf32>
    %c0_1 = arith.constant 0 : index
    %c0_2 = arith.constant 0 : index
    %7 = vector.load %arg8[%c0_1, %c0_2] : memref<256x128xf32, #tpu.memory_space<vmem>>, vector<256x128xf32>
    %c0_3 = arith.constant 0 : index
    %c0_4 = arith.constant 0 : index
    %8 = vector.load %arg2[%c0_3, %c0_4] : memref<256x384xbf16, #tpu.memory_space<vmem>>, vector<256x384xbf16>
    %9 = arith.truncf %6 : vector<384x128xf32> to vector<384x128xbf16>
    %cst = arith.constant dense<0.000000e+00> : vector<256x128xf32>
    %10 = tpu.matmul %8, %9, %cst {dimension_numbers = #tpu.dot_dimension_numbers<[1], [0], [0], [1], [0, 0, 1, 1], [], []>} : vector<256x384xbf16>, vector<384x128xbf16>, vector<256x128xf32> -> vector<256x128xf32>
    %11 = arith.addf %7, %10 : vector<256x128xf32>
    %c0_5 = arith.constant 0 : index
    %c0_6 = arith.constant 0 : index
    %12 = vector.load %arg8[%c0_5, %c0_6] : memref<256x128xf32, #tpu.memory_space<vmem>>, vector<256x128xf32>
    tpu.vector_store %arg8[%c0_5, %c0_6], %11 {strides = array<i32>} : memref<256x128xf32, #tpu.memory_space<vmem>>, vector<256x128xf32>,
    %c1_i32 = arith.constant 1 : i32
    %13 = arith.cmpi eq, %arg1, %c1_i32 : i32
    %14 = arith.extui %13 : i1 to i32
    %c0_i32_7 = arith.constant 0 : i32
    %15 = arith.cmpi ne, %14, %c0_i32_7 : i32
    scf.if %15 {
      %c0_8 = arith.constant 0 : index
      %c0_9 = arith.constant 0 : index
      %16 = vector.load %arg3[%c0_8, %c0_9] : memref<256x128xf32, #tpu.memory_space<vmem>>, vector<256x128xf32>
      %c0_10 = arith.constant 0 : index
      %c0_11 = arith.constant 0 : index
      %17 = vector.load %arg8[%c0_10, %c0_11] : memref<256x128xf32, #tpu.memory_space<vmem>>, vector<256x128xf32>
      %cst_12 = arith.constant 1.000000e+00 : f32
      %18 = vector.broadcast %cst_12 : f32 to vector<256x128xf32>
      %19 = arith.mulf %18, %17 : vector<256x128xf32>
      %20 = arith.addf %16, %19 : vector<256x128xf32>
      %c0_13 = arith.constant 0 : index
      %c0_14 = arith.constant 0 : index
      %21 = vector.load %arg5[%c0_13, %c0_14] : memref<128x128xf32, #tpu.memory_space<vmem>>, vector<128x128xf32>
      %cst_15 = arith.constant dense<0.000000e+00> : vector<256x128xf32>
      %22 = tpu.matmul %20, %21, %cst_15 {dimension_numbers = #tpu.dot_dimension_numbers<[1], [0], [0], [1], [0, 0, 1, 1], [], []>} : vector<256x128xf32>, vector<128x128xf32>, vector<256x128xf32> -> vector<256x128xf32>
      %c0_16 = arith.constant 0 : index
      %c0_17 = arith.constant 0 : index
      %23 = vector.load %arg6[%c0_16, %c0_17] : memref<1x128xf32, #tpu.memory_space<vmem>>, vector<1x128xf32>
      %24 = vector.broadcast %23 : vector<1x128xf32> to vector<256x128xf32>
      %25 = arith.addf %22, %24 : vector<256x128xf32>
      %cst_18 = arith.constant 0.000000e+00 : f32
      %26 = vector.broadcast %cst_18 : f32 to vector<256x128xf32>
      %27 = arith.maximumf %25, %26 : vector<256x128xf32>
      %c0_19 = arith.constant 0 : index
      %c0_20 = arith.constant 0 : index
      %28 = vector.load %arg7[%c0_19, %c0_20] : memref<256x128xf32, #tpu.memory_space<vmem>>, vector<256x128xf32>
      tpu.vector_store %arg7[%c0_19, %c0_20], %27 {strides = array<i32>} : memref<256x128xf32, #tpu.memory_space<vmem>>, vector<256x128xf32>,
    } else {
    }
    return
  }
  func.func @transform_0(%arg0: i32, %arg1: i32) -> (i32, i32) {
    %c0_i32 = arith.constant 0 : i32
    return %arg0, %arg1 : i32, i32
  }
  func.func @transform_1(%arg0: i32, %arg1: i32) -> (i32, i32) {
    %c0_i32 = arith.constant 0 : i32
    %c0_i32_0 = arith.constant 0 : i32
    return %arg0, %c0_i32 : i32, i32
  }
  func.func @transform_2(%arg0: i32, %arg1: i32) -> (i32, i32) {
    %c0_i32 = arith.constant 0 : i32
    %c0_i32_0 = arith.constant 0 : i32
    %c0_i32_1 = arith.constant 0 : i32
    return %c0_i32, %c0_i32_0 : i32, i32
  }
  func.func @transform_3(%arg0: i32, %arg1: i32) -> (i32, i32) {
    %c0_i32 = arith.constant 0 : i32
    %c0_i32_0 = arith.constant 0 : i32
    %c0_i32_1 = arith.constant 0 : i32
    return %c0_i32, %c0_i32_0 : i32, i32
  }
  func.func @transform_4(%arg0: i32, %arg1: i32) -> (i32, i32) {
    %c0_i32 = arith.constant 0 : i32
    %c0_i32_0 = arith.constant 0 : i32
    %c0_i32_1 = arith.constant 0 : i32
    return %c0_i32, %c0_i32_0 : i32, i32
  }
  func.func @transform_5(%arg0: i32, %arg1: i32) -> (i32, i32) {
    %c0_i32 = arith.constant 0 : i32
    %c0_i32_0 = arith.constant 0 : i32
    return %arg0, %c0_i32 : i32, i32
  }
}

</mosaic_0001>

<llo_original>
// kernel: tpu_custom_call.1
$region0: #{tpu_custom_call.1}
  #allocation0 [shape = 'u32[]', space=smem, size = 0x4, offset = 0x4, fixed_abs, tag = 'smem constant byte address 0x4 - core index']
  #allocation1 [shape = 'u32[144,128]{1,0:T(1,128)}', space=vmem, size = 0x12000, scoped, tag = 'internal scratch']
  #allocation2 [shape = 'f32[256,128]{1,0:T(8,128)}', space=vmem, size = 0x20000, scoped, tag = 'scratch operand']
  %s0 = inlined_call_operand.hbm [shape: bf16[768,768], index: 0, kind: input, shape index: {}]
  %s1 = inlined_call_operand.hbm [shape: f32[768,128], index: 1, kind: input, shape index: {}]
  %s2 = inlined_call_operand.hbm [shape: f32[768,128], index: 2, kind: input, shape index: {}]
  %s3 = inlined_call_operand.hbm [shape: f32[128,128], index: 3, kind: input, shape index: {}]
  %s4 = inlined_call_operand.hbm [shape: f32[1,128], index: 4, kind: input, shape index: {}]
  %s5 = inlined_call_operand.hbm [shape: f32[768,128], index: 5, kind: output, shape index: {}]
  %s6 = sld [smem:[#allocation0]]
  $region81: #{tpu_custom_call.1} parent=0
    _
  %s8 = ssub.s32 1, %s6
  %s9 = scalar_select 0, %s8, %s6
  $region1: #{tpu_custom_call.1} parent=0
    #allocation3 [shape = 'u8[393216]{0}', space=vmem, size = 0x60000, scoped, tag = 'input window, operand 0']
    #allocation4 [shape = 's32[2]{0}', space=sflag, size = 0x8, scoped, tag = 'scoped memory for tpu_custom_call.1']
    #allocation5 [shape = 's32[2]{0}', space=sflag, size = 0x8, scoped, tag = 'scoped memory for tpu_custom_call.1']
    #allocation6 [shape = 'u8[262144]{0}', space=vmem, size = 0x40000, scoped, tag = 'input window, operand 1']
    #allocation7 [shape = 's32[2]{0}', space=sflag, size = 0x8, scoped, tag = 'scoped memory for tpu_custom_call.1']
    #allocation8 [shape = 'u8[393216]{0}', space=vmem, size = 0x60000, scoped, tag = 'input window, operand 2, single buffered']
    #allocation9 [shape = 'u8[65536]{0}', space=vmem, size = 0x10000, scoped, tag = 'input window, operand 3, single buffered']
    #allocation10 [shape = 's32[1]{0}', space=sflag, size = 0x4, scoped, tag = 'scoped memory for tpu_custom_call.1']
    #allocation11 [shape = 'u8[512]{0}', space=vmem, size = 0x400, scoped, tag = 'input window, operand 4, single buffered']
    #allocation12 [shape = 'u8[262144]{0}', space=vmem, size = 0x40000, scoped, tag = 'output window, operand 0']
    %10 = vsyncpa [#allocation4], 0
    %s11 = scalar_lea.sflag [#allocation4], 1
    %12 = vsyncpa %s11, 0
    %13 = vsyncpa [#allocation7], 0
    %s14 = scalar_lea.sflag [#allocation7], 1
    %15 = vsyncpa %s14, 0
    %16 = vsyncpa [#allocation10], 0
    %17 = vsyncpa [#allocation5], 0
    %s18 = scalar_lea.sflag [#allocation5], 1
    %19 = vsyncpa %s18, 0
    loop: start=0, step=1, limit=8
    $region2: #{tpu_custom_call.1} parent=1 // loop_pre_header
      _
    $region3: #{tpu_custom_call.1} parent=1 // loop_header
      %s21 = sphi 0, %s25
      %p22 = scmp.ge.s32.totalorder %s21, 8
      %s28 = sphi 0, %s40
      %s29 = sphi 0, %s36
      %s30 = sphi 0, %s28
      %s31 = sphi 0, %s29
      %s32 = sphi 0, %s30
      %s33 = sphi 0, %s31
      %s45 = sphi 0, %s47
      %s48 = sphi 0, %s45
      %s49 = sphi 0, %s48
      %s65 = sphi 0, %s49
      %s71 = sphi 0, %s73
      %s74 = sphi 0, %s71
      %s75 = sphi 0, %s74
      %s91 = sphi 0, %s75
      %s95 = sphi 0, %s95
      %s97 = sphi 0, %s95
      %s98 = sphi 0, %s97
      %s112 = sphi 0, %s98
      %s116 = sphi 0, %s116
      %s118 = sphi 0, %s116
      %s119 = sphi 0, %s118
      %s133 = sphi 0, %s119
      %s137 = sphi 0, %s137
      %s139 = sphi 0, %s137
      %s140 = sphi 0, %s139
      %s154 = sphi 0, %s140
      %s160 = sphi 0, %s162
      %s163 = sphi 0, %s160
      %s164 = sphi 0, %s163
      %s180 = sphi 0, %s164
    $region4: #{tpu_custom_call.1} parent=1 // loop_header_branch
      %24 = sbr.rel (%p22) target = $region8
    $region5: #{tpu_custom_call.1} parent=1 // loop_body
      %s26 = ssub.s32 %s21, 1
      %s27 = ssub.s32 %s21, 2
      %s34 = sadd.s32 1, %s29
      %p35 = scmp.ge.s32.totalorder %s34, 2
      %s36 = scalar_select %p35, 0, %s34
      %s37 = sadd.s32 1, %s28
      %s38 = scalar_select %p35, %s37, %s28
      %p39 = scmp.ge.s32.totalorder %s38, 3
      %s40 = scalar_select %p39, 0, %s38
      %s41 = ssub.s32 %s28, %s40
      %s42 = ssub.s32 %s29, %s36
      %s43 = sor.u32 %s41, %s42
      %p44 = scmp.eq.s32.totalorder %s43, 0
      %s46 = sadd.s32 %s45, 1
      %s47 = scalar_select %p44, %s45, %s46
      %p50 = pneg %p44
      %p51 = scmp.eq.s32.totalorder %s21, 5
      %p52 = por %p50, %p51
      %p53 = scmp.ne.s32.totalorder %s45, %s48
      %p54 = scmp.eq.s32.totalorder %s21, 0
      %p55 = por %p53, %p54
      %p56 = scmp.ne.s32.totalorder %s45, %s48
      %p57 = scmp.eq.s32.totalorder %s26, 5
      %p58 = por %p56, %p57
      %p59 = scmp.ne.s32.totalorder %s48, %s49
      %p60 = scmp.eq.s32.totalorder %s26, 0
      %p61 = por %p59, %p60
      %p62 = scmp.ne.s32.totalorder %s48, %s49
      %p63 = scmp.eq.s32.totalorder %s27, 5
      %p64 = por %p62, %p63
      %p66 = scmp.ne.s32.totalorder %s49, %s65
      %p67 = scmp.eq.s32.totalorder %s27, 0
      %p68 = por %p66, %p67
      %s69 = ssub.s32 %s28, %s40
      %p70 = scmp.eq.s32.totalorder %s69, 0
      %s72 = sadd.s32 %s71, 1
      %s73 = scalar_select %p70, %s71, %s72
      %p76 = pneg %p70
      %p77 = scmp.eq.s32.totalorder %s21, 5
      %p78 = por %p76, %p77
      %p79 = scmp.ne.s32.totalorder %s71, %s74
      %p80 = scmp.eq.s32.totalorder %s21, 0
      %p81 = por %p79, %p80
      %p82 = scmp.ne.s32.totalorder %s71, %s74
      %p83 = scmp.eq.s32.totalorder %s26, 5
      %p84 = por %p82, %p83
      %p85 = scmp.ne.s32.totalorder %s74, %s75
      %p86 = scmp.eq.s32.totalorder %s26, 0
      %p87 = por %p85, %p86
      %p88 = scmp.ne.s32.totalorder %s74, %s75
      %p89 = scmp.eq.s32.totalorder %s27, 5
      %p90 = por %p88, %p89
      %p92 = scmp.ne.s32.totalorder %s75, %s91
      %p93 = scmp.eq.s32.totalorder %s27, 0
      %p94 = por %p92, %p93
      %s96 = sadd.s32 %s95, 1
      %p99 = scmp.eq.s32.totalorder %s21, 5
      %p100 = scmp.ne.s32.totalorder %s95, %s97
      %p101 = scmp.eq.s32.totalorder %s21, 0
      %p102 = por %p100, %p101
      %p103 = scmp.ne.s32.totalorder %s95, %s97
      %p104 = scmp.eq.s32.totalorder %s26, 5
      %p105 = por %p103, %p104
      %p106 = scmp.ne.s32.totalorder %s97, %s98
      %p107 = scmp.eq.s32.totalorder %s26, 0
      %p108 = por %p106, %p107
      %p109 = scmp.ne.s32.totalorder %s97, %s98
      %p110 = scmp.eq.s32.totalorder %s27, 5
      %p111 = por %p109, %p110
      %p113 = scmp.ne.s32.totalorder %s98, %s112
      %p114 = scmp.eq.s32.totalorder %s27, 0
      %p115 = por %p113, %p114
      %s117 = sadd.s32 %s116, 1
      %p120 = scmp.eq.s32.totalorder %s21, 5
      %p121 = scmp.ne.s32.totalorder %s116, %s118
      %p122 = scmp.eq.s32.totalorder %s21, 0
      %p123 = por %p121, %p122
      %p124 = scmp.ne.s32.totalorder %s116, %s118
      %p125 = scmp.eq.s32.totalorder %s26, 5
      %p126 = por %p124, %p125
      %p127 = scmp.ne.s32.totalorder %s118, %s119
      %p128 = scmp.eq.s32.totalorder %s26, 0
      %p129 = por %p127, %p128
      %p130 = scmp.ne.s32.totalorder %s118, %s119
      %p131 = scmp.eq.s32.totalorder %s27, 5
      %p132 = por %p130, %p131
      %p134 = scmp.ne.s32.totalorder %s119, %s133
      %p135 = scmp.eq.s32.totalorder %s27, 0
      %p136 = por %p134, %p135
      %s138 = sadd.s32 %s137, 1
      %p141 = scmp.eq.s32.totalorder %s21, 5
      %p142 = scmp.ne.s32.totalorder %s137, %s139
      %p143 = scmp.eq.s32.totalorder %s21, 0
      %p144 = por %p142, %p143
      %p145 = scmp.ne.s32.totalorder %s137, %s139
      %p146 = scmp.eq.s32.totalorder %s26, 5
      %p147 = por %p145, %p146
      %p148 = scmp.ne.s32.totalorder %s139, %s140
      %p149 = scmp.eq.s32.totalorder %s26, 0
      %p150 = por %p148, %p149
      %p151 = scmp.ne.s32.totalorder %s139, %s140
      %p152 = scmp.eq.s32.totalorder %s27, 5
      %p153 = por %p151, %p152
      %p155 = scmp.ne.s32.totalorder %s140, %s154
      %p156 = scmp.eq.s32.totalorder %s27, 0
      %p157 = por %p155, %p156
      %s158 = ssub.s32 %s28, %s40
      %p159 = scmp.eq.s32.totalorder %s158, 0
      %s161 = sadd.s32 %s160, 1
      %s162 = scalar_select %p159, %s160, %s161
      %p165 = pneg %p159
      %p166 = scmp.eq.s32.totalorder %s21, 5
      %p167 = por %p165, %p166
      %p168 = scmp.ne.s32.totalorder %s160, %s163
      %p169 = scmp.eq.s32.totalorder %s21, 0
      %p170 = por %p168, %p169
      %p171 = scmp.ne.s32.totalorder %s160, %s163
      %p172 = scmp.eq.s32.totalorder %s26, 5
      %p173 = por %p171, %p172
      %p174 = scmp.ne.s32.totalorder %s163, %s164
      %p175 = scmp.eq.s32.totalorder %s26, 0
      %p176 = por %p174, %p175
      %p177 = scmp.ne.s32.totalorder %s163, %s164
      %p178 = scmp.eq.s32.totalorder %s27, 5
      %p179 = por %p177, %p178
      %p181 = scmp.ne.s32.totalorder %s164, %s180
      %p182 = scmp.eq.s32.totalorder %s27, 0
      %p183 = por %p181, %p182
      %p184 = scmp.le.s32.totalorder 1, %s21
      %p185 = scmp.lt.s32.totalorder %s21, 7
      %p186 = pnand %p184, %p185
      %p187 = pneg %p186
      // Predicated region
      $region9: #{tpu_custom_call.1} parent=5 // pred_check
        _
      $region10: #{tpu_custom_call.1} parent=5 // pred_check_branch
        %189 = sbr.rel (%p186) target = $region12
      $region11: #{tpu_custom_call.1} parent=5 // pred_region
        %s190 = ssub.s32 %s21, 1
        // Predicated region
        $region13: #{tpu_custom_call.1} parent=11 // pred_check
          %p191 = pneg %p108
        $region14: #{tpu_custom_call.1} parent=11 // pred_check_branch
          %193 = sbr.rel (%p191) target = $region16
        $region15: #{tpu_custom_call.1} parent=11 // pred_region
          %s195 = ssub.s32 12288, 12288
          %196 = vsyncadd [#allocation7], %s195
          %s197 = sshll.u32 [#allocation8], 4
          %s198 = int_to_ptr.vmem [resolvable:$true] %s197
          %203 = dma.hbm_to_vmem [thread:$0]  %s2, 12288, %s198, [#allocation7], 128, 128, 8
        $region16: #{tpu_custom_call.1} parent=11 // pred_fallthru
          _
        // Predicated region
        $region17: #{tpu_custom_call.1} parent=11 // pred_check
          %p204 = pneg %p129
        $region18: #{tpu_custom_call.1} parent=11 // pred_check_branch
          %206 = sbr.rel (%p204) target = $region20
        $region19: #{tpu_custom_call.1} parent=11 // pred_region
          %s208 = ssub.s32 2048, 2048
          %209 = vsyncadd [#allocation10], %s208
          %s210 = sshll.u32 [#allocation9], 4
          %s211 = int_to_ptr.vmem [resolvable:$true] %s210
          %216 = dma.hbm_to_vmem [thread:$0]  %s3, 2048, %s211, [#allocation10], 128, 128, 8
        $region20: #{tpu_custom_call.1} parent=11 // pred_fallthru
          _
        // Predicated region
        $region21: #{tpu_custom_call.1} parent=11 // pred_check
          %p217 = pneg %p150
        $region22: #{tpu_custom_call.1} parent=11 // pred_check_branch
          %219 = sbr.rel (%p217) target = $region24
        $region23: #{tpu_custom_call.1} parent=11 // pred_region
          %s221 = ssub.s32 16, 16
          %222 = vsyncadd [#allocation10], %s221
          %s224 = sshll.u32 [#allocation11], 4
          %s225 = int_to_ptr.vmem [resolvable:$true] %s224
          %227 = dma.hbm_to_vmem [thread:$0]  %s4, 16, %s225, [#allocation10]
        $region24: #{tpu_custom_call.1} parent=11 // pred_fallthru
          _
      $region12: #{tpu_custom_call.1} parent=5 // pred_fallthru
        _
      %p228 = scmp.lt.s32.totalorder %s21, 6
      // Predicated region
      $region25: #{tpu_custom_call.1} parent=5 // pred_check
        %p229 = pneg %p228
      $region26: #{tpu_custom_call.1} parent=5 // pred_check_branch
        %231 = sbr.rel (%p229) target = $region28
      $region27: #{tpu_custom_call.1} parent=5 // pred_region
        // Predicated region
        $region29: #{tpu_custom_call.1} parent=27 // pred_check
          %p232 = pneg %p55
        $region30: #{tpu_custom_call.1} parent=27 // pred_check_branch
          %234 = sbr.rel (%p232) target = $region32
        $region31: #{tpu_custom_call.1} parent=27 // pred_region
          %s235 = sand.u32 %s45, 1
          %s236 = scalar_lea.sflag [#allocation4], %s235
          %s237 = sand.u32 %s45, 1
          %s238 = smul.addr %s237, 384
          %s239 = scalar_lea.vmem [#allocation3], %s238
          %s240 = smul.u32 32, %s28
          %s241 = smul.u32 3, %s29
          %s243 = ssub.s32 6144, 6144
          %244 = vsyncadd %s236, %s243
          %s245 = smul.addr %s240, 6
          %s246 = sadd.s32 %s241, %s245
          %s247 = smul.addr %s246, 64
          %s248 = scalar_lea.hbm %s0, %s247
          %s249 = sshll.u32 %s239, 4
          %s250 = int_to_ptr.vmem [resolvable:$true] %s249
          %255 = dma.hbm_to_vmem [thread:$0]  %s248, 6144, %s250, %s236, 384, 192, 12
        $region32: #{tpu_custom_call.1} parent=27 // pred_fallthru
          _
        // Predicated region
        $region33: #{tpu_custom_call.1} parent=27 // pred_check
          %p256 = pneg %p81
        $region34: #{tpu_custom_call.1} parent=27 // pred_check_branch
          %258 = sbr.rel (%p256) target = $region36
        $region35: #{tpu_custom_call.1} parent=27 // pred_region
          %s259 = sand.u32 %s21, 1
          %s260 = scalar_lea.sflag [#allocation7], %s259
          %s261 = sand.u32 %s71, 1
          %s262 = smul.addr %s261, 256
          %s263 = scalar_lea.vmem [#allocation6], %s262
          %s264 = smul.u32 32, %s28
          %s266 = ssub.s32 4096, 4096
          %267 = vsyncadd %s260, %s266
          %s268 = smul.addr %s264, 128
          %s269 = scalar_lea.hbm %s1, %s268
          %s270 = sshll.u32 %s263, 4
          %s271 = int_to_ptr.vmem [resolvable:$true] %s270
          %276 = dma.hbm_to_vmem [thread:$0]  %s269, 4096, %s271, %s260, 128, 128, 8
        $region36: #{tpu_custom_call.1} parent=27 // pred_fallthru
          _
      $region28: #{tpu_custom_call.1} parent=5 // pred_fallthru
        _
      %p277 = scmp.le.s32.totalorder 1, %s21
      %p278 = scmp.lt.s32.totalorder %s21, 7
      %p279 = pnand %p277, %p278
      %p280 = pneg %p279
      // Predicated region
      $region37: #{tpu_custom_call.1} parent=5 // pred_check
        _
      $region38: #{tpu_custom_call.1} parent=5 // pred_check_branch
        %282 = sbr.rel (%p279) target = $region40
      $region39: #{tpu_custom_call.1} parent=5 // pred_region
        %s283 = ssub.s32 %s21, 1
        %s284 = sand.u32 %s48, 1
        %s285 = scalar_lea.sflag [#allocation4], %s284
        %s286 = sand.u32 %s48, 1
        %s287 = smul.addr %s286, 384
        %s288 = scalar_lea.vmem [#allocation3], %s287
        // Predicated region
        $region41: #{tpu_custom_call.1} parent=39 // pred_check
          %p289 = pneg %p61
        $region42: #{tpu_custom_call.1} parent=39 // pred_check_branch
          %291 = sbr.rel (%p289) target = $region44
        $region43: #{tpu_custom_call.1} parent=39 // pred_region
          %292 = dma.done %s285, 6144
        $region44: #{tpu_custom_call.1} parent=39 // pred_fallthru
          _
        %s293 = sand.u32 %s26, 1
        %s294 = scalar_lea.sflag [#allocation7], %s293
        %s295 = sand.u32 %s74, 1
        %s296 = smul.addr %s295, 256
        %s297 = scalar_lea.vmem [#allocation6], %s296
        // Predicated region
        $region45: #{tpu_custom_call.1} parent=39 // pred_check
          %p298 = pneg %p87
        $region46: #{tpu_custom_call.1} parent=39 // pred_check_branch
          %300 = sbr.rel (%p298) target = $region48
        $region47: #{tpu_custom_call.1} parent=39 // pred_region
          %301 = dma.done %s294, 4096
        $region48: #{tpu_custom_call.1} parent=39 // pred_fallthru
          _
        // Predicated region
        $region49: #{tpu_custom_call.1} parent=39 // pred_check
          %p302 = pneg %p108
        $region50: #{tpu_custom_call.1} parent=39 // pred_check_branch
          %304 = sbr.rel (%p302) target = $region52
        $region51: #{tpu_custom_call.1} parent=39 // pred_region
          %305 = dma.done [#allocation7], 12288
        $region52: #{tpu_custom_call.1} parent=39 // pred_fallthru
          _
        // Predicated region
        $region53: #{tpu_custom_call.1} parent=39 // pred_check
          %p306 = pneg %p129
        $region54: #{tpu_custom_call.1} parent=39 // pred_check_branch
          %308 = sbr.rel (%p306) target = $region56
        $region55: #{tpu_custom_call.1} parent=39 // pred_region
          %309 = dma.done [#allocation10], 2048
        $region56: #{tpu_custom_call.1} parent=39 // pred_fallthru
          _
        // Predicated region
        $region57: #{tpu_custom_call.1} parent=39 // pred_check
          %p310 = pneg %p150
        $region58: #{tpu_custom_call.1} parent=39 // pred_check_branch
          %312 = sbr.rel (%p310) target = $region60
        $region59: #{tpu_custom_call.1} parent=39 // pred_region
          %313 = dma.done [#allocation10], 16
        $region60: #{tpu_custom_call.1} parent=39 // pred_fallthru
          _
        %s314 = sand.u32 %s48, 1
        %s315 = scalar_lea.sflag [#allocation4], %s314
        %s316 = sand.u32 %s48, 1
        %s317 = smul.addr %s316, 384
        %s318 = scalar_lea.vmem [#allocation3], %s317
        %p319 = pneg %p61
        %p320 = pneg %p58
        %s321 = sand.u32 %s26, 1
        %s322 = scalar_lea.sflag [#allocation7], %s321
        %s323 = sand.u32 %s74, 1
        %s324 = smul.addr %s323, 256
        %s325 = scalar_lea.vmem [#allocation6], %s324
        %p326 = pneg %p87
        %p327 = pneg %p84
        %p328 = pneg %p108
        %p329 = pneg %p105
        %p330 = pneg %p129
        %p331 = pneg %p126
        %p332 = pneg %p150
        %p333 = pneg %p147
        %p334 = pneg %p176
        %p335 = pneg %p173
        %s336 = sand.u32 %s163, 1
        %s337 = scalar_lea.sflag [#allocation5], %s336
        %s338 = sand.u32 %s163, 1
        %s339 = smul.addr %s338, 256
        %s340 = scalar_lea.vmem [#allocation12], %s339
        %s341 = smul.u32 32, %s30
        %s342 = smul.u32 3, %s31
        %s343 = smul.u32 32, %s30
        %s344 = smul.u32 32, %s30
        %p346 = scmp.eq.s32.totalorder %s31, 0
        // Predicated region
        $region61: #{tpu_custom_call.1} parent=39 // pred_check
          %p347 = pneg %p346
        $region62: #{tpu_custom_call.1} parent=39 // pred_check_branch
          %349 = sbr.rel (%p347) target = $region64
        $region63: #{tpu_custom_call.1} parent=39 // pred_region
          %350 = vst [vmem:[#allocation2] sm:$0xff] 0.0
          %351 = vst [vmem:[#allocation2 + $0x8] sm:$0xff] 0.0
          %352 = vst [vmem:[#allocation2 + $0x10] sm:$0xff] 0.0
          %353 = vst [vmem:[#allocation2 + $0x18] sm:$0xff] 0.0
          %354 = vst [vmem:[#allocation2 + $0x20] sm:$0xff] 0.0
          %355 = vst [vmem:[#allocation2 + $0x28] sm:$0xff] 0.0
          %356 = vst [vmem:[#allocation2 + $0x30] sm:$0xff] 0.0
          %357 = vst [vmem:[#allocation2 + $0x38] sm:$0xff] 0.0
          %358 = vst [vmem:[#allocation2 + $0x40] sm:$0xff] 0.0
          %359 = vst [vmem:[#allocation2 + $0x48] sm:$0xff] 0.0
          %360 = vst [vmem:[#allocation2 + $0x50] sm:$0xff] 0.0
          %361 = vst [vmem:[#allocation2 + $0x58] sm:$0xff] 0.0
          %362 = vst [vmem:[#allocation2 + $0x60] sm:$0xff] 0.0
          %363 = vst [vmem:[#allocation2 + $0x68] sm:$0xff] 0.0
          %364 = vst [vmem:[#allocation2 + $0x70] sm:$0xff] 0.0
          %365 = vst [vmem:[#allocation2 + $0x78] sm:$0xff] 0.0
          %366 = vst [vmem:[#allocation2 + $0x80] sm:$0xff] 0.0
          %367 = vst [vmem:[#allocation2 + $0x88] sm:$0xff] 0.0
          %368 = vst [vmem:[#allocation2 + $0x90] sm:$0xff] 0.0
          %369 = vst [vmem:[#allocation2 + $0x98] sm:$0xff] 0.0
          %370 = vst [vmem:[#allocation2 + $0xa0] sm:$0xff] 0.0
          %371 = vst [vmem:[#allocation2 + $0xa8] sm:$0xff] 0.0
          %372 = vst [vmem:[#allocation2 + $0xb0] sm:$0xff] 0.0
          %373 = vst [vmem:[#allocation2 + $0xb8] sm:$0xff] 0.0
          %374 = vst [vmem:[#allocation2 + $0xc0] sm:$0xff] 0.0
          %375 = vst [vmem:[#allocation2 + $0xc8] sm:$0xff] 0.0
          %376 = vst [vmem:[#allocation2 + $0xd0] sm:$0xff] 0.0
          %377 = vst [vmem:[#allocation2 + $0xd8] sm:$0xff] 0.0
          %378 = vst [vmem:[#allocation2 + $0xe0] sm:$0xff] 0.0
          %379 = vst [vmem:[#allocation2 + $0xe8] sm:$0xff] 0.0
          %380 = vst [vmem:[#allocation2 + $0xf0] sm:$0xff] 0.0
          %381 = vst [vmem:[#allocation2 + $0xf8] sm:$0xff] 0.0
        $region64: #{tpu_custom_call.1} parent=39 // pred_fallthru
          _
        %s382 = smul.u32 %s31, 384
        %s383 = scalar_lea.vmem [#allocation8], %s382
        %v384 = vld [vmem:[%s383] sm:$0xff]
        %v385 = vld [vmem:[%s383 + $0x8] sm:$0xff]
        %v386 = vld [vmem:[%s383 + $0x10] sm:$0xff]
        %v387 = vld [vmem:[%s383 + $0x18] sm:$0xff]
        %v388 = vld [vmem:[%s383 + $0x20] sm:$0xff]
        %v389 = vld [vmem:[%s383 + $0x28] sm:$0xff]
        %v390 = vld [vmem:[%s383 + $0x30] sm:$0xff]
        %v391 = vld [vmem:[%s383 + $0x38] sm:$0xff]
        %v392 = vld [vmem:[%s383 + $0x40] sm:$0xff]
        %v393 = vld [vmem:[%s383 + $0x48] sm:$0xff]
        %v394 = vld [vmem:[%s383 + $0x50] sm:$0xff]
        %v395 = vld [vmem:[%s383 + $0x58] sm:$0xff]
        %v396 = vld [vmem:[%s383 + $0x60] sm:$0xff]
        %v397 = vld [vmem:[%s383 + $0x68] sm:$0xff]
        %v398 = vld [vmem:[%s383 + $0x70] sm:$0xff]
        %v399 = vld [vmem:[%s383 + $0x78] sm:$0xff]
        %v400 = vld [vmem:[%s383 + $0x80] sm:$0xff]
        %v401 = vld [vmem:[%s383 + $0x88] sm:$0xff]
        %v402 = vld [vmem:[%s383 + $0x90] sm:$0xff]
        %v403 = vld [vmem:[%s383 + $0x98] sm:$0xff]
        %v404 = vld [vmem:[%s383 + $0xa0] sm:$0xff]
        %v405 = vld [vmem:[%s383 + $0xa8] sm:$0xff]
        %v406 = vld [vmem:[%s383 + $0xb0] sm:$0xff]
        %v407 = vld [vmem:[%s383 + $0xb8] sm:$0xff]
        %v408 = vld [vmem:[%s383 + $0xc0] sm:$0xff]
        %v409 = vld [vmem:[%s383 + $0xc8] sm:$0xff]
        %v410 = vld [vmem:[%s383 + $0xd0] sm:$0xff]
        %v411 = vld [vmem:[%s383 + $0xd8] sm:$0xff]
        %v412 = vld [vmem:[%s383 + $0xe0] sm:$0xff]
        %v413 = vld [vmem:[%s383 + $0xe8] sm:$0xff]
        %v414 = vld [vmem:[%s383 + $0xf0] sm:$0xff]
        %v415 = vld [vmem:[%s383 + $0xf8] sm:$0xff]
        %v416 = vld [vmem:[%s383 + $0x100] sm:$0xff]
        %v417 = vld [vmem:[%s383 + $0x108] sm:$0xff]
        %v418 = vld [vmem:[%s383 + $0x110] sm:$0xff]
        %v419 = vld [vmem:[%s383 + $0x118] sm:$0xff]
        %v420 = vld [vmem:[%s383 + $0x120] sm:$0xff]
        %v421 = vld [vmem:[%s383 + $0x128] sm:$0xff]
        %v422 = vld [vmem:[%s383 + $0x130] sm:$0xff]
        %v423 = vld [vmem:[%s383 + $0x138] sm:$0xff]
        %v424 = vld [vmem:[%s383 + $0x140] sm:$0xff]
        %v425 = vld [vmem:[%s383 + $0x148] sm:$0xff]
        %v426 = vld [vmem:[%s383 + $0x150] sm:$0xff]
        %v427 = vld [vmem:[%s383 + $0x158] sm:$0xff]
        %v428 = vld [vmem:[%s383 + $0x160] sm:$0xff]
        %v429 = vld [vmem:[%s383 + $0x168] sm:$0xff]
        %v430 = vld [vmem:[%s383 + $0x170] sm:$0xff]
        %v431 = vld [vmem:[%s383 + $0x178] sm:$0xff]
        %v432 = vld [vmem:[#allocation2] sm:$0xff]
        %v433 = vld [vmem:[#allocation2 + $0x8] sm:$0xff]
        %v434 = vld [vmem:[#allocation2 + $0x10] sm:$0xff]
        %v435 = vld [vmem:[#allocation2 + $0x18] sm:$0xff]
        %v436 = vld [vmem:[#allocation2 + $0x20] sm:$0xff]
        %v437 = vld [vmem:[#allocation2 + $0x28] sm:$0xff]
        %v438 = vld [vmem:[#allocation2 + $0x30] sm:$0xff]
        %v439 = vld [vmem:[#allocation2 + $0x38] sm:$0xff]
        %v440 = vld [vmem:[#allocation2 + $0x40] sm:$0xff]
        %v441 = vld [vmem:[#allocation2 + $0x48] sm:$0xff]
        %v442 = vld [vmem:[#allocation2 + $0x50] sm:$0xff]
        %v443 = vld [vmem:[#allocation2 + $0x58] sm:$0xff]
        %v444 = vld [vmem:[#allocation2 + $0x60] sm:$0xff]
        %v445 = vld [vmem:[#allocation2 + $0x68] sm:$0xff]
        %v446 = vld [vmem:[#allocation2 + $0x70] sm:$0xff]
        %v447 = vld [vmem:[#allocation2 + $0x78] sm:$0xff]
        %v448 = vld [vmem:[#allocation2 + $0x80] sm:$0xff]
        %v449 = vld [vmem:[#allocation2 + $0x88] sm:$0xff]
        %v450 = vld [vmem:[#allocation2 + $0x90] sm:$0xff]
        %v451 = vld [vmem:[#allocation2 + $0x98] sm:$0xff]
        %v452 = vld [vmem:[#allocation2 + $0xa0] sm:$0xff]
        %v453 = vld [vmem:[#allocation2 + $0xa8] sm:$0xff]
        %v454 = vld [vmem:[#allocation2 + $0xb0] sm:$0xff]
        %v455 = vld [vmem:[#allocation2 + $0xb8] sm:$0xff]
        %v456 = vld [vmem:[#allocation2 + $0xc0] sm:$0xff]
        %v457 = vld [vmem:[#allocation2 + $0xc8] sm:$0xff]
        %v458 = vld [vmem:[#allocation2 + $0xd0] sm:$0xff]
        %v459 = vld [vmem:[#allocation2 + $0xd8] sm:$0xff]
        %v460 = vld [vmem:[#allocation2 + $0xe0] sm:$0xff]
        %v461 = vld [vmem:[#allocation2 + $0xe8] sm:$0xff]
        %v462 = vld [vmem:[#allocation2 + $0xf0] sm:$0xff]
        %v463 = vld [vmem:[#allocation2 + $0xf8] sm:$0xff]
        %v464 = vld [vmem:[%s288] sm:$0xff]
        %v465 = vld [vmem:[%s288 + $0x8] sm:$0xf]
        %v466 = vld [vmem:[%s288 + $0xc] sm:$0xff]
        %v467 = vld [vmem:[%s288 + $0x14] sm:$0xf]
        %v468 = vld [vmem:[%s288 + $0x18] sm:$0xff]
        %v469 = vld [vmem:[%s288 + $0x20] sm:$0xf]
        %v470 = vld [vmem:[%s288 + $0x24] sm:$0xff]
        %v471 = vld [vmem:[%s288 + $0x2c] sm:$0xf]
        %v472 = vld [vmem:[%s288 + $0x30] sm:$0xff]
        %v473 = vld [vmem:[%s288 + $0x38] sm:$0xf]
        %v474 = vld [vmem:[%s288 + $0x3c] sm:$0xff]
        %v475 = vld [vmem:[%s288 + $0x44] sm:$0xf]
        %v476 = vld [vmem:[%s288 + $0x48] sm:$0xff]
        %v477 = vld [vmem:[%s288 + $0x50] sm:$0xf]
        %v478 = vld [vmem:[%s288 + $0x54] sm:$0xff]
        %v479 = vld [vmem:[%s288 + $0x5c] sm:$0xf]
        %v480 = vld [vmem:[%s288 + $0x60] sm:$0xff]
        %v481 = vld [vmem:[%s288 + $0x68] sm:$0xf]
        %v482 = vld [vmem:[%s288 + $0x6c] sm:$0xff]
        %v483 = vld [vmem:[%s288 + $0x74] sm:$0xf]
        %v484 = vld [vmem:[%s288 + $0x78] sm:$0xff]
        %v485 = vld [vmem:[%s288 + $0x80] sm:$0xf]
        %v486 = vld [vmem:[%s288 + $0x84] sm:$0xff]
        %v487 = vld [vmem:[%s288 + $0x8c] sm:$0xf]
        %v488 = vld [vmem:[%s288 + $0x90] sm:$0xff]
        %v489 = vld [vmem:[%s288 + $0x98] sm:$0xf]
        %v490 = vld [vmem:[%s288 + $0x9c] sm:$0xff]
        %v491 = vld [vmem:[%s288 + $0xa4] sm:$0xf]
        %v492 = vld [vmem:[%s288 + $0xa8] sm:$0xff]
        %v493 = vld [vmem:[%s288 + $0xb0] sm:$0xf]
        %v494 = vld [vmem:[%s288 + $0xb4] sm:$0xff]
        %v495 = vld [vmem:[%s288 + $0xbc] sm:$0xf]
        %v496 = vld [vmem:[%s288 + $0xc0] sm:$0xff]
        %v497 = vld [vmem:[%s288 + $0xc8] sm:$0xf]
        %v498 = vld [vmem:[%s288 + $0xcc] sm:$0xff]
        %v499 = vld [vmem:[%s288 + $0xd4] sm:$0xf]
        %v500 = vld [vmem:[%s288 + $0xd8] sm:$0xff]
        %v501 = vld [vmem:[%s288 + $0xe0] sm:$0xf]
        %v502 = vld [vmem:[%s288 + $0xe4] sm:$0xff]
        %v503 = vld [vmem:[%s288 + $0xec] sm:$0xf]
        %v504 = vld [vmem:[%s288 + $0xf0] sm:$0xff]
        %v505 = vld [vmem:[%s288 + $0xf8] sm:$0xf]
        %v506 = vld [vmem:[%s288 + $0xfc] sm:$0xff]
        %v507 = vld [vmem:[%s288 + $0x104] sm:$0xf]
        %v508 = vld [vmem:[%s288 + $0x108] sm:$0xff]
        %v509 = vld [vmem:[%s288 + $0x110] sm:$0xf]
        %v510 = vld [vmem:[%s288 + $0x114] sm:$0xff]
        %v511 = vld [vmem:[%s288 + $0x11c] sm:$0xf]
        %v512 = vld [vmem:[%s288 + $0x120] sm:$0xff]
        %v513 = vld [vmem:[%s288 + $0x128] sm:$0xf]
        %v514 = vld [vmem:[%s288 + $0x12c] sm:$0xff]
        %v515 = vld [vmem:[%s288 + $0x134] sm:$0xf]
        %v516 = vld [vmem:[%s288 + $0x138] sm:$0xff]
        %v517 = vld [vmem:[%s288 + $0x140] sm:$0xf]
        %v518 = vld [vmem:[%s288 + $0x144] sm:$0xff]
        %v519 = vld [vmem:[%s288 + $0x14c] sm:$0xf]
        %v520 = vld [vmem:[%s288 + $0x150] sm:$0xff]
        %v521 = vld [vmem:[%s288 + $0x158] sm:$0xf]
        %v522 = vld [vmem:[%s288 + $0x15c] sm:$0xff]
        %v523 = vld [vmem:[%s288 + $0x164] sm:$0xf]
        %v524 = vld [vmem:[%s288 + $0x168] sm:$0xff]
        %v525 = vld [vmem:[%s288 + $0x170] sm:$0xf]
        %v526 = vld [vmem:[%s288 + $0x174] sm:$0xff]
        %v527 = vld [vmem:[%s288 + $0x17c] sm:$0xf]
        %v528 = vpack.c.bf16 %v385, %v384
        %v529 = vpack.c.bf16 %v387, %v386
        %v530 = vpack.c.bf16 %v389, %v388
        %v531 = vpack.c.bf16 %v391, %v390
        %v532 = vpack.c.bf16 %v393, %v392
        %v533 = vpack.c.bf16 %v395, %v394
        %v534 = vpack.c.bf16 %v397, %v396
        %v535 = vpack.c.bf16 %v399, %v398
        %v536 = vpack.c.bf16 %v401, %v400
        %v537 = vpack.c.bf16 %v403, %v402
        %v538 = vpack.c.bf16 %v405, %v404
        %v539 = vpack.c.bf16 %v407, %v406
        %v540 = vpack.c.bf16 %v409, %v408
        %v541 = vpack.c.bf16 %v411, %v410
        %v542 = vpack.c.bf16 %v413, %v412
        %v543 = vpack.c.bf16 %v415, %v414
        %v544 = vpack.c.bf16 %v417, %v416
        %v545 = vpack.c.bf16 %v419, %v418
        %v546 = vpack.c.bf16 %v421, %v420
        %v547 = vpack.c.bf16 %v423, %v422
        %v548 = vpack.c.bf16 %v425, %v424
        %v549 = vpack.c.bf16 %v427, %v426
        %v550 = vpack.c.bf16 %v429, %v428
        %v551 = vpack.c.bf16 %v431, %v430
        %v616 = vunpack.c.l.b16 %v464
        %v617 = vunpack.c.h.b16 %v464
        %v618 = vunpack.c.l.b16 %v465
        %v619 = vunpack.c.l.b16 %v466
        %v620 = vunpack.c.h.b16 %v466
        %v621 = vunpack.c.l.b16 %v467
        %v622 = vunpack.c.l.b16 %v468
        %v623 = vunpack.c.h.b16 %v468
        %v624 = vunpack.c.l.b16 %v469
        %v625 = vunpack.c.l.b16 %v470
        %v626 = vunpack.c.h.b16 %v470
        %v627 = vunpack.c.l.b16 %v471
        %v628 = vunpack.c.l.b16 %v472
        %v629 = vunpack.c.h.b16 %v472
        %v630 = vunpack.c.l.b16 %v473
        %v631 = vunpack.c.l.b16 %v474
        %v632 = vunpack.c.h.b16 %v474
        %v633 = vunpack.c.l.b16 %v475
        %v634 = vunpack.c.l.b16 %v476
        %v635 = vunpack.c.h.b16 %v476
        %v636 = vunpack.c.l.b16 %v477
        %v637 = vunpack.c.l.b16 %v478
        %v638 = vunpack.c.h.b16 %v478
        %v639 = vunpack.c.l.b16 %v479
        %v640 = vunpack.c.l.b16 %v480
        %v641 = vunpack.c.h.b16 %v480
        %v642 = vunpack.c.l.b16 %v481
        %v643 = vunpack.c.l.b16 %v482
        %v644 = vunpack.c.h.b16 %v482
        %v645 = vunpack.c.l.b16 %v483
        %v646 = vunpack.c.l.b16 %v484
        %v647 = vunpack.c.h.b16 %v484
        %v648 = vunpack.c.l.b16 %v485
        %v649 = vunpack.c.l.b16 %v486
        %v650 = vunpack.c.h.b16 %v486
        %v651 = vunpack.c.l.b16 %v487
        %v652 = vunpack.c.l.b16 %v488
        %v653 = vunpack.c.h.b16 %v488
        %v654 = vunpack.c.l.b16 %v489
        %v655 = vunpack.c.l.b16 %v490
        %v656 = vunpack.c.h.b16 %v490
        %v657 = vunpack.c.l.b16 %v491
        %v658 = vunpack.c.l.b16 %v492
        %v659 = vunpack.c.h.b16 %v492
        %v660 = vunpack.c.l.b16 %v493
        %v661 = vunpack.c.l.b16 %v494
        %v662 = vunpack.c.h.b16 %v494
        %v663 = vunpack.c.l.b16 %v495
        %v664 = vunpack.c.l.b16 %v496
        %v665 = vunpack.c.h.b16 %v496
        %v666 = vunpack.c.l.b16 %v497
        %v667 = vunpack.c.l.b16 %v498
        %v668 = vunpack.c.h.b16 %v498
        %v669 = vunpack.c.l.b16 %v499
        %v670 = vunpack.c.l.b16 %v500
        %v671 = vunpack.c.h.b16 %v500
        %v672 = vunpack.c.l.b16 %v501
        %v673 = vunpack.c.l.b16 %v502
        %v674 = vunpack.c.h.b16 %v502
        %v675 = vunpack.c.l.b16 %v503
        %v676 = vunpack.c.l.b16 %v504
        %v677 = vunpack.c.h.b16 %v504
        %v678 = vunpack.c.l.b16 %v505
        %v679 = vunpack.c.l.b16 %v506
        %v680 = vunpack.c.h.b16 %v506
        %v681 = vunpack.c.l.b16 %v507
        %v682 = vunpack.c.l.b16 %v508
        %v683 = vunpack.c.h.b16 %v508
        %v684 = vunpack.c.l.b16 %v509
        %v685 = vunpack.c.l.b16 %v510
        %v686 = vunpack.c.h.b16 %v510
        %v687 = vunpack.c.l.b16 %v511
        %v688 = vunpack.c.l.b16 %v512
        %v689 = vunpack.c.h.b16 %v512
        %v690 = vunpack.c.l.b16 %v513
        %v691 = vunpack.c.l.b16 %v514
        %v692 = vunpack.c.h.b16 %v514
        %v693 = vunpack.c.l.b16 %v515
        %v694 = vunpack.c.l.b16 %v516
        %v695 = vunpack.c.h.b16 %v516
        %v696 = vunpack.c.l.b16 %v517
        %v697 = vunpack.c.l.b16 %v518
        %v698 = vunpack.c.h.b16 %v518
        %v699 = vunpack.c.l.b16 %v519
        %v700 = vunpack.c.l.b16 %v520
        %v701 = vunpack.c.h.b16 %v520
        %v702 = vunpack.c.l.b16 %v521
        %v703 = vunpack.c.l.b16 %v522
        %v704 = vunpack.c.h.b16 %v522
        %v705 = vunpack.c.l.b16 %v523
        %v706 = vunpack.c.l.b16 %v524
        %v707 = vunpack.c.h.b16 %v524
        %v708 = vunpack.c.l.b16 %v525
        %v709 = vunpack.c.l.b16 %v526
        %v710 = vunpack.c.h.b16 %v526
        %v711 = vunpack.c.l.b16 %v527
        %v712 = vpack.c.b16 %v619, %v616
        %v713 = vpack.c.b16 %v620, %v617
        %v714 = vpack.c.b16 %v621, %v618
        %v715 = vpack.c.b16 %v625, %v622
        %v716 = vpack.c.b16 %v626, %v623
        %v717 = vpack.c.b16 %v627, %v624
        %v718 = vpack.c.b16 %v631, %v628
        %v719 = vpack.c.b16 %v632, %v629
        %v720 = vpack.c.b16 %v633, %v630
        %v721 = vpack.c.b16 %v637, %v634
        %v722 = vpack.c.b16 %v638, %v635
        %v723 = vpack.c.b16 %v639, %v636
        %v724 = vpack.c.b16 %v643, %v640
        %v725 = vpack.c.b16 %v644, %v641
        %v726 = vpack.c.b16 %v645, %v642
        %v727 = vpack.c.b16 %v649, %v646
        %v728 = vpack.c.b16 %v650, %v647
        %v729 = vpack.c.b16 %v651, %v648
        %v730 = vpack.c.b16 %v655, %v652
        %v731 = vpack.c.b16 %v656, %v653
        %v732 = vpack.c.b16 %v657, %v654
        %v733 = vpack.c.b16 %v661, %v658
        %v734 = vpack.c.b16 %v662, %v659
        %v735 = vpack.c.b16 %v663, %v660
        %v736 = vpack.c.b16 %v667, %v664
        %v737 = vpack.c.b16 %v668, %v665
        %v738 = vpack.c.b16 %v669, %v666
        %v739 = vpack.c.b16 %v673, %v670
        %v740 = vpack.c.b16 %v674, %v671
        %v741 = vpack.c.b16 %v675, %v672
        %v742 = vpack.c.b16 %v679, %v676
        %v743 = vpack.c.b16 %v680, %v677
        %v744 = vpack.c.b16 %v681, %v678
        %v745 = vpack.c.b16 %v685, %v682
        %v746 = vpack.c.b16 %v686, %v683
        %v747 = vpack.c.b16 %v687, %v684
        %v748 = vpack.c.b16 %v691, %v688
        %v749 = vpack.c.b16 %v692, %v689
        %v750 = vpack.c.b16 %v693, %v690
        %v751 = vpack.c.b16 %v697, %v694
        %v752 = vpack.c.b16 %v698, %v695
        %v753 = vpack.c.b16 %v699, %v696
        %v754 = vpack.c.b16 %v703, %v700
        %v755 = vpack.c.b16 %v704, %v701
        %v756 = vpack.c.b16 %v705, %v702
        %v757 = vpack.c.b16 %v709, %v706
        %v758 = vpack.c.b16 %v710, %v707
        %v759 = vpack.c.b16 %v711, %v708
        %808 = vmatprep.subr.bf16.mxu0 0
        %809 = vmatpush1.bf16.msra.mxu0 %v535
        %810 = vmatprep.subr.bf16.mxu0 0
        %811 = vmatpush1.bf16.msra.mxu0 %v534
        %812 = vmatprep.subr.bf16.mxu0 0
        %813 = vmatpush1.bf16.msra.mxu0 %v533
        %814 = vmatprep.subr.bf16.mxu0 0
        %815 = vmatpush1.bf16.msra.mxu0 %v532
        %816 = vmatprep.subr.bf16.mxu0 0
        %817 = vmatpush1.bf16.msra.mxu0 %v531
        %818 = vmatprep.subr.bf16.mxu0 0
        %819 = vmatpush1.bf16.msra.mxu0 %v530
        %820 = vmatprep.subr.bf16.mxu0 0
        %821 = vmatpush1.bf16.msra.mxu0 %v529
        %822 = vmatprep.subr.bf16.mxu0 0
        %823 = vmatpush1.bf16.msra.mxu0 %v528
        %824 = vmatprep.subr.bf16.mxu0 0
        %825 = vmatpush2.bf16.msra.mxu0 %v543
        %826 = vmatprep.subr.bf16.mxu0 0
        %827 = vmatpush2.bf16.msra.mxu0 %v542
        %828 = vmatprep.subr.bf16.mxu0 0
        %829 = vmatpush2.bf16.msra.mxu0 %v541
        %830 = vmatprep.subr.bf16.mxu0 0
        %831 = vmatpush2.bf16.msra.mxu0 %v540
        %832 = vmatprep.subr.bf16.mxu0 0
        %833 = vmatpush2.bf16.msra.mxu0 %v539
        %834 = vmatprep.subr.bf16.mxu0 0
        %835 = vmatpush2.bf16.msra.mxu0 %v538
        %836 = vmatprep.subr.bf16.mxu0 0
        %837 = vmatpush2.bf16.msra.mxu0 %v537
        %838 = vmatprep.subr.bf16.mxu0 0
        %839 = vmatpush2.bf16.msra.mxu0 %v536
        %840 = vmatprep.mubr.bf16.mxu0 %v713
        %841 = vmatmul.mubr.bf16.gmra.mxu0 %v712
        %v842 = vpop.f32.mrf.mxu0
        %v843 = vadd.f32 0.0, %v842
        %v844 = vpop.f32.mrf.mxu0
        %v845 = vpop.f32.mrf.mxu0
        %v846 = vadd.f32 0.0, %v845
        %v847 = vpop.f32.mrf.mxu0
        %848 = vmatprep.mubr.bf16.mxu0 %v716
        %849 = vmatmul.mubr.bf16.gmra.mxu0 %v715
        %v850 = vpop.f32.mrf.mxu0
        %v851 = vadd.f32 0.0, %v850
        %v852 = vpop.f32.mrf.mxu0
        %v853 = vpop.f32.mrf.mxu0
        %v854 = vadd.f32 0.0, %v853
        %v855 = vpop.f32.mrf.mxu0
        %856 = vmatprep.mubr.bf16.mxu0 %v719
        %857 = vmatmul.mubr.bf16.gmra.mxu0 %v718
        %v858 = vpop.f32.mrf.mxu0
        %v859 = vadd.f32 0.0, %v858
        %v860 = vpop.f32.mrf.mxu0
        %v861 = vpop.f32.mrf.mxu0
        %v862 = vadd.f32 0.0, %v861
        %v863 = vpop.f32.mrf.mxu0
        %864 = vmatprep.mubr.bf16.mxu0 %v722
        %865 = vmatmul.mubr.bf16.gmra.mxu0 %v721
        %v866 = vpop.f32.mrf.mxu0
        %v867 = vadd.f32 0.0, %v866
        %v868 = vpop.f32.mrf.mxu0
        %v869 = vpop.f32.mrf.mxu0
        %v870 = vadd.f32 0.0, %v869
        %v871 = vpop.f32.mrf.mxu0
        %872 = vmatprep.mubr.bf16.mxu0 %v725
        %873 = vmatmul.mubr.bf16.gmra.mxu0 %v724
        %v874 = vpop.f32.mrf.mxu0
        %v875 = vadd.f32 0.0, %v874
        %v876 = vpop.f32.mrf.mxu0
        %v877 = vpop.f32.mrf.mxu0
        %v878 = vadd.f32 0.0, %v877
        %v879 = vpop.f32.mrf.mxu0
        %880 = vmatprep.mubr.bf16.mxu0 %v728
        %881 = vmatmul.mubr.bf16.gmra.mxu0 %v727
        %v882 = vpop.f32.mrf.mxu0
        %v883 = vadd.f32 0.0, %v882
        %v884 = vpop.f32.mrf.mxu0
        %v885 = vpop.f32.mrf.mxu0
        %v886 = vadd.f32 0.0, %v885
        %v887 = vpop.f32.mrf.mxu0
        %888 = vmatprep.mubr.bf16.mxu0 %v731
        %889 = vmatmul.mubr.bf16.gmra.mxu0 %v730
        %v890 = vpop.f32.mrf.mxu0
        %v891 = vadd.f32 0.0, %v890
        %v892 = vpop.f32.mrf.mxu0
        %v893 = vpop.f32.mrf.mxu0
        %v894 = vadd.f32 0.0, %v893
        %v895 = vpop.f32.mrf.mxu0
        %896 = vmatprep.mubr.bf16.mxu0 %v734
        %897 = vmatmul.mubr.bf16.gmra.mxu0 %v733
        %v898 = vpop.f32.mrf.mxu0
        %v899 = vadd.f32 0.0, %v898
        %v900 = vpop.f32.mrf.mxu0
        %v901 = vpop.f32.mrf.mxu0
        %v902 = vadd.f32 0.0, %v901
        %v903 = vpop.f32.mrf.mxu0
        %904 = vmatprep.mubr.bf16.mxu0 %v737
        %905 = vmatmul.mubr.bf16.gmra.mxu0 %v736
        %v906 = vpop.f32.mrf.mxu0
        %v907 = vadd.f32 0.0, %v906
        %v908 = vpop.f32.mrf.mxu0
        %v909 = vpop.f32.mrf.mxu0
        %v910 = vadd.f32 0.0, %v909
        %v911 = vpop.f32.mrf.mxu0
        %912 = vmatprep.mubr.bf16.mxu0 %v740
        %913 = vmatmul.mubr.bf16.gmra.mxu0 %v739
        %v914 = vpop.f32.mrf.mxu0
        %v915 = vadd.f32 0.0, %v914
        %v916 = vpop.f32.mrf.mxu0
        %v917 = vpop.f32.mrf.mxu0
        %v918 = vadd.f32 0.0, %v917
        %v919 = vpop.f32.mrf.mxu0
        %920 = vmatprep.mubr.bf16.mxu0 %v743
        %921 = vmatmul.mubr.bf16.gmra.mxu0 %v742
        %v922 = vpop.f32.mrf.mxu0
        %v923 = vadd.f32 0.0, %v922
        %v924 = vpop.f32.mrf.mxu0
        %v925 = vpop.f32.mrf.mxu0
        %v926 = vadd.f32 0.0, %v925
        %v927 = vpop.f32.mrf.mxu0
        %928 = vmatprep.mubr.bf16.mxu0 %v746
        %929 = vmatmul.mubr.bf16.gmra.mxu0 %v745
        %v930 = vpop.f32.mrf.mxu0
        %v931 = vadd.f32 0.0, %v930
        %v932 = vpop.f32.mrf.mxu0
        %v933 = vpop.f32.mrf.mxu0
        %v934 = vadd.f32 0.0, %v933
        %v935 = vpop.f32.mrf.mxu0
        %936 = vmatprep.mubr.bf16.mxu0 %v749
        %937 = vmatmul.mubr.bf16.gmra.mxu0 %v748
        %v938 = vpop.f32.mrf.mxu0
        %v939 = vadd.f32 0.0, %v938
        %v940 = vpop.f32.mrf.mxu0
        %v941 = vpop.f32.mrf.mxu0
        %v942 = vadd.f32 0.0, %v941
        %v943 = vpop.f32.mrf.mxu0
        %944 = vmatprep.mubr.bf16.mxu0 %v752
        %945 = vmatmul.mubr.bf16.gmra.mxu0 %v751
        %v946 = vpop.f32.mrf.mxu0
        %v947 = vadd.f32 0.0, %v946
        %v948 = vpop.f32.mrf.mxu0
        %v949 = vpop.f32.mrf.mxu0
        %v950 = vadd.f32 0.0, %v949
        %v951 = vpop.f32.mrf.mxu0
        %952 = vmatprep.mubr.bf16.mxu0 %v755
        %953 = vmatmul.mubr.bf16.gmra.mxu0 %v754
        %v954 = vpop.f32.mrf.mxu0
        %v955 = vadd.f32 0.0, %v954
        %v956 = vpop.f32.mrf.mxu0
        %v957 = vpop.f32.mrf.mxu0
        %v958 = vadd.f32 0.0, %v957
        %v959 = vpop.f32.mrf.mxu0
        %960 = vmatprep.mubr.bf16.mxu0 %v758
        %961 = vmatmul.mubr.bf16.gmra.mxu0 %v757
        %v962 = vpop.f32.mrf.mxu0
        %v963 = vadd.f32 0.0, %v962
        %v964 = vpop.f32.mrf.mxu0
        %v965 = vpop.f32.mrf.mxu0
        %v966 = vadd.f32 0.0, %v965
        %v967 = vpop.f32.mrf.mxu0
        %968 = vdwg.mxu0
        %969 = vmatprep.subr.bf16.mxu0 0
        %970 = vmatpush1.bf16.msra.mxu0 %v551
        %971 = vmatprep.subr.bf16.mxu0 0
        %972 = vmatpush1.bf16.msra.mxu0 %v550
        %973 = vmatprep.subr.bf16.mxu0 0
        %974 = vmatpush1.bf16.msra.mxu0 %v549
        %975 = vmatprep.subr.bf16.mxu0 0
        %976 = vmatpush1.bf16.msra.mxu0 %v548
        %977 = vmatprep.subr.bf16.mxu0 0
        %978 = vmatpush1.bf16.msra.mxu0 %v547
        %979 = vmatprep.subr.bf16.mxu0 0
        %980 = vmatpush1.bf16.msra.mxu0 %v546
        %981 = vmatprep.subr.bf16.mxu0 0
        %982 = vmatpush1.bf16.msra.mxu0 %v545
        %983 = vmatprep.subr.bf16.mxu0 0
        %984 = vmatpush1.bf16.msra.mxu0 %v544
        %985 = vmatprep.subr.bf16.mxu0 0
        %986 = vmatpush2.bf16.msra.mxu0 0
        %987 = vmatprep.subr.bf16.mxu0 0
        %988 = vmatpush2.bf16.msra.mxu0 0
        %989 = vmatprep.subr.bf16.mxu0 0
        %990 = vmatpush2.bf16.msra.mxu0 0
        %991 = vmatprep.subr.bf16.mxu0 0
        %992 = vmatpush2.bf16.msra.mxu0 0
        %993 = vmatprep.subr.bf16.mxu0 0
        %994 = vmatpush2.bf16.msra.mxu0 0
        %995 = vmatprep.subr.bf16.mxu0 0
        %996 = vmatpush2.bf16.msra.mxu0 0
        %997 = vmatprep.subr.bf16.mxu0 0
        %998 = vmatpush2.bf16.msra.mxu0 0
        %999 = vmatprep.subr.bf16.mxu0 0
        %1000 = vmatpush2.bf16.msra.mxu0 0
        %1001 = vmatprep.mubr.bf16.mxu0 0
        %1002 = vmatmul.mubr.bf16.gmra.mxu0 %v714
        %v1003 = vpop.f32.mrf.mxu0
        %v1004 = vadd.f32 %v843, %v1003
        %v1005 = vpop.f32.mrf.mxu0
        %v1006 = vpop.f32.mrf.mxu0
        %v1007 = vadd.f32 %v846, %v1006
        %v1008 = vpop.f32.mrf.mxu0
        %1009 = vmatprep.mubr.bf16.mxu0 0
        %1010 = vmatmul.mubr.bf16.gmra.mxu0 %v717
        %v1011 = vpop.f32.mrf.mxu0
        %v1012 = vadd.f32 %v851, %v1011
        %v1013 = vpop.f32.mrf.mxu0
        %v1014 = vpop.f32.mrf.mxu0
        %v1015 = vadd.f32 %v854, %v1014
        %v1016 = vpop.f32.mrf.mxu0
        %1017 = vmatprep.mubr.bf16.mxu0 0
        %1018 = vmatmul.mubr.bf16.gmra.mxu0 %v720
        %v1019 = vpop.f32.mrf.mxu0
        %v1020 = vadd.f32 %v859, %v1019
        %v1021 = vpop.f32.mrf.mxu0
        %v1022 = vpop.f32.mrf.mxu0
        %v1023 = vadd.f32 %v862, %v1022
        %v1024 = vpop.f32.mrf.mxu0
        %1025 = vmatprep.mubr.bf16.mxu0 0
        %1026 = vmatmul.mubr.bf16.gmra.mxu0 %v723
        %v1027 = vpop.f32.mrf.mxu0
        %v1028 = vadd.f32 %v867, %v1027
        %v1029 = vpop.f32.mrf.mxu0
        %v1030 = vpop.f32.mrf.mxu0
        %v1031 = vadd.f32 %v870, %v1030
        %v1032 = vpop.f32.mrf.mxu0
        %1033 = vmatprep.mubr.bf16.mxu0 0
        %1034 = vmatmul.mubr.bf16.gmra.mxu0 %v726
        %v1035 = vpop.f32.mrf.mxu0
        %v1036 = vadd.f32 %v875, %v1035
        %v1037 = vpop.f32.mrf.mxu0
        %v1038 = vpop.f32.mrf.mxu0
        %v1039 = vadd.f32 %v878, %v1038
        %v1040 = vpop.f32.mrf.mxu0
        %1041 = vmatprep.mubr.bf16.mxu0 0
        %1042 = vmatmul.mubr.bf16.gmra.mxu0 %v729
        %v1043 = vpop.f32.mrf.mxu0
        %v1044 = vadd.f32 %v883, %v1043
        %v1045 = vpop.f32.mrf.mxu0
        %v1046 = vpop.f32.mrf.mxu0
        %v1047 = vadd.f32 %v886, %v1046
        %v1048 = vpop.f32.mrf.mxu0
        %1049 = vmatprep.mubr.bf16.mxu0 0
        %1050 = vmatmul.mubr.bf16.gmra.mxu0 %v732
        %v1051 = vpop.f32.mrf.mxu0
        %v1052 = vadd.f32 %v891, %v1051
        %v1053 = vpop.f32.mrf.mxu0
        %v1054 = vpop.f32.mrf.mxu0
        %v1055 = vadd.f32 %v894, %v1054
        %v1056 = vpop.f32.mrf.mxu0
        %1057 = vmatprep.mubr.bf16.mxu0 0
        %1058 = vmatmul.mubr.bf16.gmra.mxu0 %v735
        %v1059 = vpop.f32.mrf.mxu0
        %v1060 = vadd.f32 %v899, %v1059
        %v1061 = vpop.f32.mrf.mxu0
        %v1062 = vpop.f32.mrf.mxu0
        %v1063 = vadd.f32 %v902, %v1062
        %v1064 = vpop.f32.mrf.mxu0
        %1065 = vmatprep.mubr.bf16.mxu0 0
        %1066 = vmatmul.mubr.bf16.gmra.mxu0 %v738
        %v1067 = vpop.f32.mrf.mxu0
        %v1068 = vadd.f32 %v907, %v1067
        %v1069 = vpop.f32.mrf.mxu0
        %v1070 = vpop.f32.mrf.mxu0
        %v1071 = vadd.f32 %v910, %v1070
        %v1072 = vpop.f32.mrf.mxu0
        %1073 = vmatprep.mubr.bf16.mxu0 0
        %1074 = vmatmul.mubr.bf16.gmra.mxu0 %v741
        %v1075 = vpop.f32.mrf.mxu0
        %v1076 = vadd.f32 %v915, %v1075
        %v1077 = vpop.f32.mrf.mxu0
        %v1078 = vpop.f32.mrf.mxu0
        %v1079 = vadd.f32 %v918, %v1078
        %v1080 = vpop.f32.mrf.mxu0
        %1081 = vmatprep.mubr.bf16.mxu0 0
        %1082 = vmatmul.mubr.bf16.gmra.mxu0 %v744
        %v1083 = vpop.f32.mrf.mxu0
        %v1084 = vadd.f32 %v923, %v1083
        %v1085 = vpop.f32.mrf.mxu0
        %v1086 = vpop.f32.mrf.mxu0
        %v1087 = vadd.f32 %v926, %v1086
        %v1088 = vpop.f32.mrf.mxu0
        %1089 = vmatprep.mubr.bf16.mxu0 0
        %1090 = vmatmul.mubr.bf16.gmra.mxu0 %v747
        %v1091 = vpop.f32.mrf.mxu0
        %v1092 = vadd.f32 %v931, %v1091
        %v1093 = vpop.f32.mrf.mxu0
        %v1094 = vpop.f32.mrf.mxu0
        %v1095 = vadd.f32 %v934, %v1094
        %v1096 = vpop.f32.mrf.mxu0
        %1097 = vmatprep.mubr.bf16.mxu0 0
        %1098 = vmatmul.mubr.bf16.gmra.mxu0 %v750
        %v1099 = vpop.f32.mrf.mxu0
        %v1100 = vadd.f32 %v939, %v1099
        %v1101 = vpop.f32.mrf.mxu0
        %v1102 = vpop.f32.mrf.mxu0
        %v1103 = vadd.f32 %v942, %v1102
        %v1104 = vpop.f32.mrf.mxu0
        %1105 = vmatprep.mubr.bf16.mxu0 0
        %1106 = vmatmul.mubr.bf16.gmra.mxu0 %v753
        %v1107 = vpop.f32.mrf.mxu0
        %v1108 = vadd.f32 %v947, %v1107
        %v1109 = vpop.f32.mrf.mxu0
        %v1110 = vpop.f32.mrf.mxu0
        %v1111 = vadd.f32 %v950, %v1110
        %v1112 = vpop.f32.mrf.mxu0
        %1113 = vmatprep.mubr.bf16.mxu0 0
        %1114 = vmatmul.mubr.bf16.gmra.mxu0 %v756
        %v1115 = vpop.f32.mrf.mxu0
        %v1116 = vadd.f32 %v955, %v1115
        %v1117 = vpop.f32.mrf.mxu0
        %v1118 = vpop.f32.mrf.mxu0
        %v1119 = vadd.f32 %v958, %v1118
        %v1120 = vpop.f32.mrf.mxu0
        %1121 = vmatprep.mubr.bf16.mxu0 0
        %1122 = vmatmul.mubr.bf16.gmra.mxu0 %v759
        %v1123 = vpop.f32.mrf.mxu0
        %v1124 = vadd.f32 %v963, %v1123
        %v1125 = vpop.f32.mrf.mxu0
        %v1126 = vpop.f32.mrf.mxu0
        %v1127 = vadd.f32 %v966, %v1126
        %v1128 = vpop.f32.mrf.mxu0
        %1129 = vdwg.mxu0
        %v1130 = vadd.f32 %v432, %v1004
        %v1131 = vadd.f32 %v433, %v1007
        %v1132 = vadd.f32 %v434, %v1012
        %v1133 = vadd.f32 %v435, %v1015
        %v1134 = vadd.f32 %v436, %v1020
        %v1135 = vadd.f32 %v437, %v1023
        %v1136 = vadd.f32 %v438, %v1028
        %v1137 = vadd.f32 %v439, %v1031
        %v1138 = vadd.f32 %v440, %v1036
        %v1139 = vadd.f32 %v441, %v1039
        %v1140 = vadd.f32 %v442, %v1044
        %v1141 = vadd.f32 %v443, %v1047
        %v1142 = vadd.f32 %v444, %v1052
        %v1143 = vadd.f32 %v445, %v1055
        %v1144 = vadd.f32 %v446, %v1060
        %v1145 = vadd.f32 %v447, %v1063
        %v1146 = vadd.f32 %v448, %v1068
        %v1147 = vadd.f32 %v449, %v1071
        %v1148 = vadd.f32 %v450, %v1076
        %v1149 = vadd.f32 %v451, %v1079
        %v1150 = vadd.f32 %v452, %v1084
        %v1151 = vadd.f32 %v453, %v1087
        %v1152 = vadd.f32 %v454, %v1092
        %v1153 = vadd.f32 %v455, %v1095
        %v1154 = vadd.f32 %v456, %v1100
        %v1155 = vadd.f32 %v457, %v1103
        %v1156 = vadd.f32 %v458, %v1108
        %v1157 = vadd.f32 %v459, %v1111
        %v1158 = vadd.f32 %v460, %v1116
        %v1159 = vadd.f32 %v461, %v1119
        %v1160 = vadd.f32 %v462, %v1124
        %v1161 = vadd.f32 %v463, %v1127
        %1162 = vst [vmem:[#allocation2] sm:$0xff] %v1130
        %1163 = vst [vmem:[#allocation2 + $0x8] sm:$0xff] %v1131
        %1164 = vst [vmem:[#allocation2 + $0x10] sm:$0xff] %v1132
        %1165 = vst [vmem:[#allocation2 + $0x18] sm:$0xff] %v1133
        %1166 = vst [vmem:[#allocation2 + $0x20] sm:$0xff] %v1134
        %1167 = vst [vmem:[#allocation2 + $0x28] sm:$0xff] %v1135
        %1168 = vst [vmem:[#allocation2 + $0x30] sm:$0xff] %v1136
        %1169 = vst [vmem:[#allocation2 + $0x38] sm:$0xff] %v1137
        %1170 = vst [vmem:[#allocation2 + $0x40] sm:$0xff] %v1138
        %1171 = vst [vmem:[#allocation2 + $0x48] sm:$0xff] %v1139
        %1172 = vst [vmem:[#allocation2 + $0x50] sm:$0xff] %v1140
        %1173 = vst [vmem:[#allocation2 + $0x58] sm:$0xff] %v1141
        %1174 = vst [vmem:[#allocation2 + $0x60] sm:$0xff] %v1142
        %1175 = vst [vmem:[#allocation2 + $0x68] sm:$0xff] %v1143
        %1176 = vst [vmem:[#allocation2 + $0x70] sm:$0xff] %v1144
        %1177 = vst [vmem:[#allocation2 + $0x78] sm:$0xff] %v1145
        %1178 = vst [vmem:[#allocation2 + $0x80] sm:$0xff] %v1146
        %1179 = vst [vmem:[#allocation2 + $0x88] sm:$0xff] %v1147
        %1180 = vst [vmem:[#allocation2 + $0x90] sm:$0xff] %v1148
        %1181 = vst [vmem:[#allocation2 + $0x98] sm:$0xff] %v1149
        %1182 = vst [vmem:[#allocation2 + $0xa0] sm:$0xff] %v1150
        %1183 = vst [vmem:[#allocation2 + $0xa8] sm:$0xff] %v1151
        %1184 = vst [vmem:[#allocation2 + $0xb0] sm:$0xff] %v1152
        %1185 = vst [vmem:[#allocation2 + $0xb8] sm:$0xff] %v1153
        %1186 = vst [vmem:[#allocation2 + $0xc0] sm:$0xff] %v1154
        %1187 = vst [vmem:[#allocation2 + $0xc8] sm:$0xff] %v1155
        %1188 = vst [vmem:[#allocation2 + $0xd0] sm:$0xff] %v1156
        %1189 = vst [vmem:[#allocation2 + $0xd8] sm:$0xff] %v1157
        %1190 = vst [vmem:[#allocation2 + $0xe0] sm:$0xff] %v1158
        %1191 = vst [vmem:[#allocation2 + $0xe8] sm:$0xff] %v1159
        %1192 = vst [vmem:[#allocation2 + $0xf0] sm:$0xff] %v1160
        %1193 = vst [vmem:[#allocation2 + $0xf8] sm:$0xff] %v1161
        %p1194 = scmp.eq.s32.totalorder %s31, 1
        // Predicated region
        $region65: #{tpu_custom_call.1} parent=39 // pred_check
          %p1195 = pneg %p1194
        $region66: #{tpu_custom_call.1} parent=39 // pred_check_branch
          %1197 = sbr.rel (%p1195) target = $region68
        $region67: #{tpu_custom_call.1} parent=39 // pred_region
          %v1198 = vld [vmem:[%s297] sm:$0xff]
          %v1199 = vld [vmem:[%s297 + $0x8] sm:$0xff]
          %v1200 = vld [vmem:[%s297 + $0x10] sm:$0xff]
          %v1201 = vld [vmem:[%s297 + $0x18] sm:$0xff]
          %v1202 = vld [vmem:[%s297 + $0x20] sm:$0xff]
          %v1203 = vld [vmem:[%s297 + $0x28] sm:$0xff]
          %v1204 = vld [vmem:[%s297 + $0x30] sm:$0xff]
          %v1205 = vld [vmem:[%s297 + $0x38] sm:$0xff]
          %v1206 = vld [vmem:[%s297 + $0x40] sm:$0xff]
          %v1207 = vld [vmem:[%s297 + $0x48] sm:$0xff]
          %v1208 = vld [vmem:[%s297 + $0x50] sm:$0xff]
          %v1209 = vld [vmem:[%s297 + $0x58] sm:$0xff]
          %v1210 = vld [vmem:[%s297 + $0x60] sm:$0xff]
          %v1211 = vld [vmem:[%s297 + $0x68] sm:$0xff]
          %v1212 = vld [vmem:[%s297 + $0x70] sm:$0xff]
          %v1213 = vld [vmem:[%s297 + $0x78] sm:$0xff]
          %v1214 = vld [vmem:[%s297 + $0x80] sm:$0xff]
          %v1215 = vld [vmem:[%s297 + $0x88] sm:$0xff]
          %v1216 = vld [vmem:[%s297 + $0x90] sm:$0xff]
          %v1217 = vld [vmem:[%s297 + $0x98] sm:$0xff]
          %v1218 = vld [vmem:[%s297 + $0xa0] sm:$0xff]
          %v1219 = vld [vmem:[%s297 + $0xa8] sm:$0xff]
          %v1220 = vld [vmem:[%s297 + $0xb0] sm:$0xff]
          %v1221 = vld [vmem:[%s297 + $0xb8] sm:$0xff]
          %v1222 = vld [vmem:[%s297 + $0xc0] sm:$0xff]
          %v1223 = vld [vmem:[%s297 + $0xc8] sm:$0xff]
          %v1224 = vld [vmem:[%s297 + $0xd0] sm:$0xff]
          %v1225 = vld [vmem:[%s297 + $0xd8] sm:$0xff]
          %v1226 = vld [vmem:[%s297 + $0xe0] sm:$0xff]
          %v1227 = vld [vmem:[%s297 + $0xe8] sm:$0xff]
          %v1228 = vld [vmem:[%s297 + $0xf0] sm:$0xff]
          %v1229 = vld [vmem:[%s297 + $0xf8] sm:$0xff]
          %v1230 = vld [vmem:[#allocation2] sm:$0xff]
          %v1231 = vld [vmem:[#allocation2 + $0x8] sm:$0xff]
          %v1232 = vld [vmem:[#allocation2 + $0x10] sm:$0xff]
          %v1233 = vld [vmem:[#allocation2 + $0x18] sm:$0xff]
          %v1234 = vld [vmem:[#allocation2 + $0x20] sm:$0xff]
          %v1235 = vld [vmem:[#allocation2 + $0x28] sm:$0xff]
          %v1236 = vld [vmem:[#allocation2 + $0x30] sm:$0xff]
          %v1237 = vld [vmem:[#allocation2 + $0x38] sm:$0xff]
          %v1238 = vld [vmem:[#allocation2 + $0x40] sm:$0xff]
          %v1239 = vld [vmem:[#allocation2 + $0x48] sm:$0xff]
          %v1240 = vld [vmem:[#allocation2 + $0x50] sm:$0xff]
          %v1241 = vld [vmem:[#allocation2 + $0x58] sm:$0xff]
          %v1242 = vld [vmem:[#allocation2 + $0x60] sm:$0xff]
          %v1243 = vld [vmem:[#allocation2 + $0x68] sm:$0xff]
          %v1244 = vld [vmem:[#allocation2 + $0x70] sm:$0xff]
          %v1245 = vld [vmem:[#allocation2 + $0x78] sm:$0xff]
          %v1246 = vld [vmem:[#allocation2 + $0x80] sm:$0xff]
          %v1247 = vld [vmem:[#allocation2 + $0x88] sm:$0xff]
          %v1248 = vld [vmem:[#allocation2 + $0x90] sm:$0xff]
          %v1249 = vld [vmem:[#allocation2 + $0x98] sm:$0xff]
          %v1250 = vld [vmem:[#allocation2 + $0xa0] sm:$0xff]
          %v1251 = vld [vmem:[#allocation2 + $0xa8] sm:$0xff]
          %v1252 = vld [vmem:[#allocation2 + $0xb0] sm:$0xff]
          %v1253 = vld [vmem:[#allocation2 + $0xb8] sm:$0xff]
          %v1254 = vld [vmem:[#allocation2 + $0xc0] sm:$0xff]
          %v1255 = vld [vmem:[#allocation2 + $0xc8] sm:$0xff]
          %v1256 = vld [vmem:[#allocation2 + $0xd0] sm:$0xff]
          %v1257 = vld [vmem:[#allocation2 + $0xd8] sm:$0xff]
          %v1258 = vld [vmem:[#allocation2 + $0xe0] sm:$0xff]
          %v1259 = vld [vmem:[#allocation2 + $0xe8] sm:$0xff]
          %v1260 = vld [vmem:[#allocation2 + $0xf0] sm:$0xff]
          %v1261 = vld [vmem:[#allocation2 + $0xf8] sm:$0xff]
          %v1262 = vadd.f32 %v1198, %v1230
          %v1263 = vadd.f32 %v1199, %v1231
          %v1264 = vadd.f32 %v1200, %v1232
          %v1265 = vadd.f32 %v1201, %v1233
          %v1266 = vadd.f32 %v1202, %v1234
          %v1267 = vadd.f32 %v1203, %v1235
          %v1268 = vadd.f32 %v1204, %v1236
          %v1269 = vadd.f32 %v1205, %v1237
          %v1270 = vadd.f32 %v1206, %v1238
          %v1271 = vadd.f32 %v1207, %v1239
          %v1272 = vadd.f32 %v1208, %v1240
          %v1273 = vadd.f32 %v1209, %v1241
          %v1274 = vadd.f32 %v1210, %v1242
          %v1275 = vadd.f32 %v1211, %v1243
          %v1276 = vadd.f32 %v1212, %v1244
          %v1277 = vadd.f32 %v1213, %v1245
          %v1278 = vadd.f32 %v1214, %v1246
          %v1279 = vadd.f32 %v1215, %v1247
          %v1280 = vadd.f32 %v1216, %v1248
          %v1281 = vadd.f32 %v1217, %v1249
          %v1282 = vadd.f32 %v1218, %v1250
          %v1283 = vadd.f32 %v1219, %v1251
          %v1284 = vadd.f32 %v1220, %v1252
          %v1285 = vadd.f32 %v1221, %v1253
          %v1286 = vadd.f32 %v1222, %v1254
          %v1287 = vadd.f32 %v1223, %v1255
          %v1288 = vadd.f32 %v1224, %v1256
          %v1289 = vadd.f32 %v1225, %v1257
          %v1290 = vadd.f32 %v1226, %v1258
          %v1291 = vadd.f32 %v1227, %v1259
          %v1292 = vadd.f32 %v1228, %v1260
          %v1293 = vadd.f32 %v1229, %v1261
          %v1294 = vld [vmem:[#allocation9] sm:$0xff]
          %v1295 = vld [vmem:[#allocation9 + $0x8] sm:$0xff]
          %v1296 = vld [vmem:[#allocation9 + $0x10] sm:$0xff]
          %v1297 = vld [vmem:[#allocation9 + $0x18] sm:$0xff]
          %v1298 = vld [vmem:[#allocation9 + $0x20] sm:$0xff]
          %v1299 = vld [vmem:[#allocation9 + $0x28] sm:$0xff]
          %v1300 = vld [vmem:[#allocation9 + $0x30] sm:$0xff]
          %v1301 = vld [vmem:[#allocation9 + $0x38] sm:$0xff]
          %v1302 = vld [vmem:[#allocation9 + $0x40] sm:$0xff]
          %v1303 = vld [vmem:[#allocation9 + $0x48] sm:$0xff]
          %v1304 = vld [vmem:[#allocation9 + $0x50] sm:$0xff]
          %v1305 = vld [vmem:[#allocation9 + $0x58] sm:$0xff]
          %v1306 = vld [vmem:[#allocation9 + $0x60] sm:$0xff]
          %v1307 = vld [vmem:[#allocation9 + $0x68] sm:$0xff]
          %v1308 = vld [vmem:[#allocation9 + $0x70] sm:$0xff]
          %v1309 = vld [vmem:[#allocation9 + $0x78] sm:$0xff]
          %v1310 = vld [vmem:[#allocation11] sm:$0x1]
          %v1312 = vlaneseq
          %v1313 = vshrl.u32 %v1312, 7
          %v1314 = vsub.s32 0, %v1313
          %v1315 = vrot.slane %v1310, %v1314
          %1317 = vmatprep.subr.mxu0 0.0
          %1318 = vmatpush1.msra.mxu0 %v1309
          %1319 = vmatprep.subr.mxu0 0.0
          %1320 = vmatpush1.msra.mxu0 %v1308
          %1321 = vmatprep.subr.mxu0 0.0
          %1322 = vmatpush1.msra.mxu0 %v1307
          %1323 = vmatprep.subr.mxu0 0.0
          %1324 = vmatpush1.msra.mxu0 %v1306
          %1325 = vmatprep.subr.mxu0 0.0
          %1326 = vmatpush1.msra.mxu0 %v1305
          %1327 = vmatprep.subr.mxu0 0.0
          %1328 = vmatpush1.msra.mxu0 %v1304
          %1329 = vmatprep.subr.mxu0 0.0
          %1330 = vmatpush1.msra.mxu0 %v1303
          %1331 = vmatprep.subr.mxu0 0.0
          %1332 = vmatpush1.msra.mxu0 %v1302
          %1333 = vmatprep.subr.mxu0 0.0
          %1334 = vmatpush1.msra.mxu0 %v1301
          %1335 = vmatprep.subr.mxu0 0.0
          %1336 = vmatpush1.msra.mxu0 %v1300
          %1337 = vmatprep.subr.mxu0 0.0
          %1338 = vmatpush1.msra.mxu0 %v1299
          %1339 = vmatprep.subr.mxu0 0.0
          %1340 = vmatpush1.msra.mxu0 %v1298
          %1341 = vmatprep.subr.mxu0 0.0
          %1342 = vmatpush1.msra.mxu0 %v1297
          %1343 = vmatprep.subr.mxu0 0.0
          %1344 = vmatpush1.msra.mxu0 %v1296
          %1345 = vmatprep.subr.mxu0 0.0
          %1346 = vmatpush1.msra.mxu0 %v1295
          %1347 = vmatprep.subr.mxu0 0.0
          %1348 = vmatpush1.msra.mxu0 %v1294
          %1349 = vmatprep.subr.mxu0 0.0
          %1350 = vmatpush2.msra.mxu0 0.0
          %1351 = vmatprep.subr.mxu0 0.0
          %1352 = vmatpush2.msra.mxu0 0.0
          %1353 = vmatprep.subr.mxu0 0.0
          %1354 = vmatpush2.msra.mxu0 0.0
          %1355 = vmatprep.subr.mxu0 0.0
          %1356 = vmatpush2.msra.mxu0 0.0
          %1357 = vmatprep.subr.mxu0 0.0
          %1358 = vmatpush2.msra.mxu0 0.0
          %1359 = vmatprep.subr.mxu0 0.0
          %1360 = vmatpush2.msra.mxu0 0.0
          %1361 = vmatprep.subr.mxu0 0.0
          %1362 = vmatpush2.msra.mxu0 0.0
          %1363 = vmatprep.subr.mxu0 0.0
          %1364 = vmatpush2.msra.mxu0 0.0
          %1365 = vmatprep.subr.mxu0 0.0
          %1366 = vmatpush2.msra.mxu0 0.0
          %1367 = vmatprep.subr.mxu0 0.0
          %1368 = vmatpush2.msra.mxu0 0.0
          %1369 = vmatprep.subr.mxu0 0.0
          %1370 = vmatpush2.msra.mxu0 0.0
          %1371 = vmatprep.subr.mxu0 0.0
          %1372 = vmatpush2.msra.mxu0 0.0
          %1373 = vmatprep.subr.mxu0 0.0
          %1374 = vmatpush2.msra.mxu0 0.0
          %1375 = vmatprep.subr.mxu0 0.0
          %1376 = vmatpush2.msra.mxu0 0.0
          %1377 = vmatprep.subr.mxu0 0.0
          %1378 = vmatpush2.msra.mxu0 0.0
          %1379 = vmatprep.subr.mxu0 0.0
          %1380 = vmatpush2.msra.mxu0 0.0
          %1381 = vmatprep.mubr.f32.mxu0 0.0
          %1382 = vmatmul.mubr.f32.gmra.mxu0 %v1262
          %v1383 = vpop.f32.mrf.mxu0
          %v1384 = vadd.f32 %v1315, %v1383
          %v1385 = vpop.f32.mrf.mxu0
          %1386 = vmatprep.mubr.f32.mxu0 0.0
          %1387 = vmatmul.mubr.f32.gmra.mxu0 %v1263
          %v1388 = vpop.f32.mrf.mxu0
          %v1389 = vadd.f32 %v1315, %v1388
          %v1390 = vpop.f32.mrf.mxu0
          %1391 = vmatprep.mubr.f32.mxu0 0.0
          %1392 = vmatmul.mubr.f32.gmra.mxu0 %v1264
          %v1393 = vpop.f32.mrf.mxu0
          %v1394 = vadd.f32 %v1315, %v1393
          %v1395 = vpop.f32.mrf.mxu0
          %1396 = vmatprep.mubr.f32.mxu0 0.0
          %1397 = vmatmul.mubr.f32.gmra.mxu0 %v1265
          %v1398 = vpop.f32.mrf.mxu0
          %v1399 = vadd.f32 %v1315, %v1398
          %v1400 = vpop.f32.mrf.mxu0
          %1401 = vmatprep.mubr.f32.mxu0 0.0
          %1402 = vmatmul.mubr.f32.gmra.mxu0 %v1266
          %v1403 = vpop.f32.mrf.mxu0
          %v1404 = vadd.f32 %v1315, %v1403
          %v1405 = vpop.f32.mrf.mxu0
          %1406 = vmatprep.mubr.f32.mxu0 0.0
          %1407 = vmatmul.mubr.f32.gmra.mxu0 %v1267
          %v1408 = vpop.f32.mrf.mxu0
          %v1409 = vadd.f32 %v1315, %v1408
          %v1410 = vpop.f32.mrf.mxu0
          %1411 = vmatprep.mubr.f32.mxu0 0.0
          %1412 = vmatmul.mubr.f32.gmra.mxu0 %v1268
          %v1413 = vpop.f32.mrf.mxu0
          %v1414 = vadd.f32 %v1315, %v1413
          %v1415 = vpop.f32.mrf.mxu0
          %1416 = vmatprep.mubr.f32.mxu0 0.0
          %1417 = vmatmul.mubr.f32.gmra.mxu0 %v1269
          %v1418 = vpop.f32.mrf.mxu0
          %v1419 = vadd.f32 %v1315, %v1418
          %v1420 = vpop.f32.mrf.mxu0
          %1421 = vmatprep.mubr.f32.mxu0 0.0
          %1422 = vmatmul.mubr.f32.gmra.mxu0 %v1270
          %v1423 = vpop.f32.mrf.mxu0
          %v1424 = vadd.f32 %v1315, %v1423
          %v1425 = vpop.f32.mrf.mxu0
          %1426 = vmatprep.mubr.f32.mxu0 0.0
          %1427 = vmatmul.mubr.f32.gmra.mxu0 %v1271
          %v1428 = vpop.f32.mrf.mxu0
          %v1429 = vadd.f32 %v1315, %v1428
          %v1430 = vpop.f32.mrf.mxu0
          %1431 = vmatprep.mubr.f32.mxu0 0.0
          %1432 = vmatmul.mubr.f32.gmra.mxu0 %v1272
          %v1433 = vpop.f32.mrf.mxu0
          %v1434 = vadd.f32 %v1315, %v1433
          %v1435 = vpop.f32.mrf.mxu0
          %1436 = vmatprep.mubr.f32.mxu0 0.0
          %1437 = vmatmul.mubr.f32.gmra.mxu0 %v1273
          %v1438 = vpop.f32.mrf.mxu0
          %v1439 = vadd.f32 %v1315, %v1438
          %v1440 = vpop.f32.mrf.mxu0
          %1441 = vmatprep.mubr.f32.mxu0 0.0
          %1442 = vmatmul.mubr.f32.gmra.mxu0 %v1274
          %v1443 = vpop.f32.mrf.mxu0
          %v1444 = vadd.f32 %v1315, %v1443
          %v1445 = vpop.f32.mrf.mxu0
          %1446 = vmatprep.mubr.f32.mxu0 0.0
          %1447 = vmatmul.mubr.f32.gmra.mxu0 %v1275
          %v1448 = vpop.f32.mrf.mxu0
          %v1449 = vadd.f32 %v1315, %v1448
          %v1450 = vpop.f32.mrf.mxu0
          %1451 = vmatprep.mubr.f32.mxu0 0.0
          %1452 = vmatmul.mubr.f32.gmra.mxu0 %v1276
          %v1453 = vpop.f32.mrf.mxu0
          %v1454 = vadd.f32 %v1315, %v1453
          %v1455 = vpop.f32.mrf.mxu0
          %1456 = vmatprep.mubr.f32.mxu0 0.0
          %1457 = vmatmul.mubr.f32.gmra.mxu0 %v1277
          %v1458 = vpop.f32.mrf.mxu0
          %v1459 = vadd.f32 %v1315, %v1458
          %v1460 = vpop.f32.mrf.mxu0
          %1461 = vmatprep.mubr.f32.mxu0 0.0
          %1462 = vmatmul.mubr.f32.gmra.mxu0 %v1278
          %v1463 = vpop.f32.mrf.mxu0
          %v1464 = vadd.f32 %v1315, %v1463
          %v1465 = vpop.f32.mrf.mxu0
          %1466 = vmatprep.mubr.f32.mxu0 0.0
          %1467 = vmatmul.mubr.f32.gmra.mxu0 %v1279
          %v1468 = vpop.f32.mrf.mxu0
          %v1469 = vadd.f32 %v1315, %v1468
          %v1470 = vpop.f32.mrf.mxu0
          %1471 = vmatprep.mubr.f32.mxu0 0.0
          %1472 = vmatmul.mubr.f32.gmra.mxu0 %v1280
          %v1473 = vpop.f32.mrf.mxu0
          %v1474 = vadd.f32 %v1315, %v1473
          %v1475 = vpop.f32.mrf.mxu0
          %1476 = vmatprep.mubr.f32.mxu0 0.0
          %1477 = vmatmul.mubr.f32.gmra.mxu0 %v1281
          %v1478 = vpop.f32.mrf.mxu0
          %v1479 = vadd.f32 %v1315, %v1478
          %v1480 = vpop.f32.mrf.mxu0
          %1481 = vmatprep.mubr.f32.mxu0 0.0
          %1482 = vmatmul.mubr.f32.gmra.mxu0 %v1282
          %v1483 = vpop.f32.mrf.mxu0
          %v1484 = vadd.f32 %v1315, %v1483
          %v1485 = vpop.f32.mrf.mxu0
          %1486 = vmatprep.mubr.f32.mxu0 0.0
          %1487 = vmatmul.mubr.f32.gmra.mxu0 %v1283
          %v1488 = vpop.f32.mrf.mxu0
          %v1489 = vadd.f32 %v1315, %v1488
          %v1490 = vpop.f32.mrf.mxu0
          %1491 = vmatprep.mubr.f32.mxu0 0.0
          %1492 = vmatmul.mubr.f32.gmra.mxu0 %v1284
          %v1493 = vpop.f32.mrf.mxu0
          %v1494 = vadd.f32 %v1315, %v1493
          %v1495 = vpop.f32.mrf.mxu0
          %1496 = vmatprep.mubr.f32.mxu0 0.0
          %1497 = vmatmul.mubr.f32.gmra.mxu0 %v1285
          %v1498 = vpop.f32.mrf.mxu0
          %v1499 = vadd.f32 %v1315, %v1498
          %v1500 = vpop.f32.mrf.mxu0
          %1501 = vmatprep.mubr.f32.mxu0 0.0
          %1502 = vmatmul.mubr.f32.gmra.mxu0 %v1286
          %v1503 = vpop.f32.mrf.mxu0
          %v1504 = vadd.f32 %v1315, %v1503
          %v1505 = vpop.f32.mrf.mxu0
          %1506 = vmatprep.mubr.f32.mxu0 0.0
          %1507 = vmatmul.mubr.f32.gmra.mxu0 %v1287
          %v1508 = vpop.f32.mrf.mxu0
          %v1509 = vadd.f32 %v1315, %v1508
          %v1510 = vpop.f32.mrf.mxu0
          %1511 = vmatprep.mubr.f32.mxu0 0.0
          %1512 = vmatmul.mubr.f32.gmra.mxu0 %v1288
          %v1513 = vpop.f32.mrf.mxu0
          %v1514 = vadd.f32 %v1315, %v1513
          %v1515 = vpop.f32.mrf.mxu0
          %1516 = vmatprep.mubr.f32.mxu0 0.0
          %1517 = vmatmul.mubr.f32.gmra.mxu0 %v1289
          %v1518 = vpop.f32.mrf.mxu0
          %v1519 = vadd.f32 %v1315, %v1518
          %v1520 = vpop.f32.mrf.mxu0
          %1521 = vmatprep.mubr.f32.mxu0 0.0
          %1522 = vmatmul.mubr.f32.gmra.mxu0 %v1290
          %v1523 = vpop.f32.mrf.mxu0
          %v1524 = vadd.f32 %v1315, %v1523
          %v1525 = vpop.f32.mrf.mxu0
          %1526 = vmatprep.mubr.f32.mxu0 0.0
          %1527 = vmatmul.mubr.f32.gmra.mxu0 %v1291
          %v1528 = vpop.f32.mrf.mxu0
          %v1529 = vadd.f32 %v1315, %v1528
          %v1530 = vpop.f32.mrf.mxu0
          %1531 = vmatprep.mubr.f32.mxu0 0.0
          %1532 = vmatmul.mubr.f32.gmra.mxu0 %v1292
          %v1533 = vpop.f32.mrf.mxu0
          %v1534 = vadd.f32 %v1315, %v1533
          %v1535 = vpop.f32.mrf.mxu0
          %1536 = vmatprep.mubr.f32.mxu0 0.0
          %1537 = vmatmul.mubr.f32.gmra.mxu0 %v1293
          %v1538 = vpop.f32.mrf.mxu0
          %v1539 = vadd.f32 %v1315, %v1538
          %v1540 = vpop.f32.mrf.mxu0
          %1541 = vdwg.mxu0
          %v1542 = vmax.f32 %v1384, 0.0
          %v1543 = vmax.f32 %v1389, 0.0
          %v1544 = vmax.f32 %v1394, 0.0
          %v1545 = vmax.f32 %v1399, 0.0
          %v1546 = vmax.f32 %v1404, 0.0
          %v1547 = vmax.f32 %v1409, 0.0
          %v1548 = vmax.f32 %v1414, 0.0
          %v1549 = vmax.f32 %v1419, 0.0
          %v1550 = vmax.f32 %v1424, 0.0
          %v1551 = vmax.f32 %v1429, 0.0
          %v1552 = vmax.f32 %v1434, 0.0
          %v1553 = vmax.f32 %v1439, 0.0
          %v1554 = vmax.f32 %v1444, 0.0
          %v1555 = vmax.f32 %v1449, 0.0
          %v1556 = vmax.f32 %v1454, 0.0
          %v1557 = vmax.f32 %v1459, 0.0
          %v1558 = vmax.f32 %v1464, 0.0
          %v1559 = vmax.f32 %v1469, 0.0
          %v1560 = vmax.f32 %v1474, 0.0
          %v1561 = vmax.f32 %v1479, 0.0
          %v1562 = vmax.f32 %v1484, 0.0
          %v1563 = vmax.f32 %v1489, 0.0
          %v1564 = vmax.f32 %v1494, 0.0
          %v1565 = vmax.f32 %v1499, 0.0
          %v1566 = vmax.f32 %v1504, 0.0
          %v1567 = vmax.f32 %v1509, 0.0
          %v1568 = vmax.f32 %v1514, 0.0
          %v1569 = vmax.f32 %v1519, 0.0
          %v1570 = vmax.f32 %v1524, 0.0
          %v1571 = vmax.f32 %v1529, 0.0
          %v1572 = vmax.f32 %v1534, 0.0
          %v1573 = vmax.f32 %v1539, 0.0
          %1574 = vst [vmem:[%s340] sm:$0xff] %v1542
          %1575 = vst [vmem:[%s340 + $0x8] sm:$0xff] %v1543
          %1576 = vst [vmem:[%s340 + $0x10] sm:$0xff] %v1544
          %1577 = vst [vmem:[%s340 + $0x18] sm:$0xff] %v1545
          %1578 = vst [vmem:[%s340 + $0x20] sm:$0xff] %v1546
          %1579 = vst [vmem:[%s340 + $0x28] sm:$0xff] %v1547
          %1580 = vst [vmem:[%s340 + $0x30] sm:$0xff] %v1548
          %1581 = vst [vmem:[%s340 + $0x38] sm:$0xff] %v1549
          %1582 = vst [vmem:[%s340 + $0x40] sm:$0xff] %v1550
          %1583 = vst [vmem:[%s340 + $0x48] sm:$0xff] %v1551
          %1584 = vst [vmem:[%s340 + $0x50] sm:$0xff] %v1552
          %1585 = vst [vmem:[%s340 + $0x58] sm:$0xff] %v1553
          %1586 = vst [vmem:[%s340 + $0x60] sm:$0xff] %v1554
          %1587 = vst [vmem:[%s340 + $0x68] sm:$0xff] %v1555
          %1588 = vst [vmem:[%s340 + $0x70] sm:$0xff] %v1556
          %1589 = vst [vmem:[%s340 + $0x78] sm:$0xff] %v1557
          %1590 = vst [vmem:[%s340 + $0x80] sm:$0xff] %v1558
          %1591 = vst [vmem:[%s340 + $0x88] sm:$0xff] %v1559
          %1592 = vst [vmem:[%s340 + $0x90] sm:$0xff] %v1560
          %1593 = vst [vmem:[%s340 + $0x98] sm:$0xff] %v1561
          %1594 = vst [vmem:[%s340 + $0xa0] sm:$0xff] %v1562
          %1595 = vst [vmem:[%s340 + $0xa8] sm:$0xff] %v1563
          %1596 = vst [vmem:[%s340 + $0xb0] sm:$0xff] %v1564
          %1597 = vst [vmem:[%s340 + $0xb8] sm:$0xff] %v1565
          %1598 = vst [vmem:[%s340 + $0xc0] sm:$0xff] %v1566
          %1599 = vst [vmem:[%s340 + $0xc8] sm:$0xff] %v1567
          %1600 = vst [vmem:[%s340 + $0xd0] sm:$0xff] %v1568
          %1601 = vst [vmem:[%s340 + $0xd8] sm:$0xff] %v1569
          %1602 = vst [vmem:[%s340 + $0xe0] sm:$0xff] %v1570
          %1603 = vst [vmem:[%s340 + $0xe8] sm:$0xff] %v1571
          %1604 = vst [vmem:[%s340 + $0xf0] sm:$0xff] %v1572
          %1605 = vst [vmem:[%s340 + $0xf8] sm:$0xff] %v1573
        $region68: #{tpu_custom_call.1} parent=39 // pred_fallthru
          _
        %s1606 = sand.u32 %s163, 1
        %s1607 = scalar_lea.sflag [#allocation5], %s1606
        %s1608 = sand.u32 %s163, 1
        %s1609 = smul.addr %s1608, 256
        %s1610 = scalar_lea.vmem [#allocation12], %s1609
        // Predicated region
        $region69: #{tpu_custom_call.1} parent=39 // pred_check
          %p1611 = pneg %p173
        $region70: #{tpu_custom_call.1} parent=39 // pred_check_branch
          %1613 = sbr.rel (%p1611) target = $region72
        $region71: #{tpu_custom_call.1} parent=39 // pred_region
          %s1614 = smul.u32 32, %s30
          %s1616 = ssub.s32 4096, 4096
          %1617 = vsyncadd %s1607, %s1616
          %s1618 = smul.addr %s1614, 128
          %s1619 = scalar_lea.hbm %s5, %s1618
          %s1620 = sshll.u32 %s1610, 4
          %s1621 = int_to_ptr.vmem [resolvable:$true] %s1620
          %1626 = dma.vmem_to_hbm [thread:$0]  %s1621, 4096, %s1619, %s1607, 128, 128, 8
        $region72: #{tpu_custom_call.1} parent=39 // pred_fallthru
          _
      $region40: #{tpu_custom_call.1} parent=5 // pred_fallthru
        _
      %p1627 = scmp.le.s32.totalorder 2, %s21
      // Predicated region
      $region73: #{tpu_custom_call.1} parent=5 // pred_check
        %p1628 = pneg %p1627
      $region74: #{tpu_custom_call.1} parent=5 // pred_check_branch
        %1630 = sbr.rel (%p1628) target = $region76
      $region75: #{tpu_custom_call.1} parent=5 // pred_region
        %s1631 = ssub.s32 %s21, 2
        // Predicated region
        $region77: #{tpu_custom_call.1} parent=75 // pred_check
          %p1632 = pneg %p179
        $region78: #{tpu_custom_call.1} parent=75 // pred_check_branch
          %1634 = sbr.rel (%p1632) target = $region80
        $region79: #{tpu_custom_call.1} parent=75 // pred_region
          %s1635 = sand.u32 %s164, 1
          %s1636 = scalar_lea.sflag [#allocation5], %s1635
          %s1637 = sand.u32 %s164, 1
          %s1638 = smul.addr %s1637, 256
          %s1639 = scalar_lea.vmem [#allocation12], %s1638
          %1640 = dma.done %s1636, 4096
        $region80: #{tpu_custom_call.1} parent=75 // pred_fallthru
          _
      $region76: #{tpu_custom_call.1} parent=5 // pred_fallthru
        _
    $region6: #{tpu_custom_call.1} parent=1 // loop_footer
      %s25 = sadd.s32 1, %s21
    $region7: #{tpu_custom_call.1} parent=1 // loop_footer_branch
      %20 = sbr.rel target = $region3
    $region8: #{tpu_custom_call.1} parent=1 // loop_exit
      _
    %1641 = vsyncpa [#allocation4], 1
    %s1642 = scalar_lea.sflag [#allocation4], 1
    %1643 = vsyncpa %s1642, 1
    %1644 = vsyncpa [#allocation7], 1
    %s1645 = scalar_lea.sflag [#allocation7], 1
    %1646 = vsyncpa %s1645, 1
    %1647 = vsyncpa [#allocation10], 1
    %1648 = vsyncpa [#allocation5], 1
    %s1649 = scalar_lea.sflag [#allocation5], 1
    %1650 = vsyncpa %s1649, 1

</llo_original>
